<compile_context>
chip_gen: v7x
topology: tpu7x:2x2x1
jax: 0.10.0
libtpu: 0.0.40
codegen_flags: <defaults>
</compile_context>

<pallas_src>
import functools

import jax
import jax.numpy as jnp
from jax.experimental import pallas as pl
from jax.experimental.pallas import tpu as pltpu

_LANES = 128      # vreg lane width
_SUBLANES = 8     # vreg sublane count


def _round_up(x, m):
    return (x + m - 1) // m * m


def _round_down(x, m):
    return (x // m) * m


def prepare_params(w1, b1, w2, b2, *, mxu_dtype=jnp.bfloat16):
    """One-time parameter prep (run once per parameter update, NOT per forward).

    Pads the action dim up to a 128-lane multiple so the kernel's output store
    is an unmasked lane-dense vst, and casts the layer-2 weight to bf16 for the
    MXU. Layer-1 params stay f32 (layer 1 runs on the VPU; v5e has no bf16 VALU).
    """
    n_actions = w2.shape[1]
    a_pad = _round_up(n_actions, _LANES)
    pad = a_pad - n_actions
    w2p = jnp.pad(w2.astype(jnp.float32), ((0, 0), (0, pad))).astype(mxu_dtype)
    b2p = jnp.pad(b2.astype(jnp.float32), ((0, 0), (0, pad)))
    return w1.astype(jnp.float32), b1.astype(jnp.float32), w2p, b2p


def mlp_kernel(x_ref, w1_ref, b1_ref, w2_ref, b2_ref, o_ref):
    """One batch tile of Linear -> ReLU -> Linear (lane-dense padded logits).

    Layer 1 (tiny K) = unrolled VPU broadcast-FMAs in f32.
    Layer 2 = MXU matmul with bf16 weights, f32 accumulation.
    """
    x = x_ref[...].astype(jnp.float32)            # (tile_b, obs)
    w1 = w1_ref[...].astype(jnp.float32)          # (obs, H)
    obs = x.shape[1]

    # Layer 1: h = b1 + sum_k x[:, k] (outer) w1[k, :]   -- keeps the MXU free.
    h = b1_ref[...].astype(jnp.float32)           # (1, H), broadcasts on first add
    for k in range(obs):                          # static unroll, obs is tiny
        h = h + x[:, k:k + 1] * w1[k:k + 1, :]
    h = jnp.maximum(h, 0.0)                       # (tile_b, H)

    # Layer 2: logits into the lane-dense (tile_b, A_pad) slab (unmasked store).
    y = jnp.dot(h.astype(w2_ref.dtype), w2_ref[...],
                preferred_element_type=jnp.float32)
    o_ref[...] = (y + b2_ref[...].astype(jnp.float32)).astype(o_ref.dtype)


def net_forward(x, w1, b1, w2p, b2p, *, n_actions, block_b=None):
    """Pallas forward pass of Net.

    x: (batch, obs) f32; w1/b1: f32; w2p/b2p: action-dim padded (bf16 / f32).
    Returns (batch, n_actions) f32 logits.
    """
    batch, obs_size = x.shape
    hidden = w1.shape[1]
    a_pad = w2p.shape[1]

    # ---- batch tiling: as few grid steps as possible (overhead-bound). ----
    # Never exceed batch (ragged handling only on the final tile; no x pad).
    if block_b is None:
        block_b = 2048
    block_b = min(block_b, batch)
    if batch >= _SUBLANES:
        block_b = max(_SUBLANES, _round_down(block_b, _SUBLANES))
    # else: block_b == batch < 8 -> full-extent block, still legal.
    grid = (pl.cdiv(batch, block_b),)

    cost = pl.CostEstimate(
        flops=2 * batch * (obs_size * hidden + hidden * n_actions),
        transcendentals=0,
        bytes_accessed=(x.size * x.dtype.itemsize
                        + w1.size * w1.dtype.itemsize
                        + b1.size * b1.dtype.itemsize
                        + w2p.size * w2p.dtype.itemsize
                        + b2p.size * b2p.dtype.itemsize
                        + batch * n_actions * 4))

    vmem = pltpu.MemorySpace.VMEM
    out = pl.pallas_call(
        mlp_kernel,
        out_shape=jax.ShapeDtypeStruct((batch, a_pad), jnp.float32),
        grid=grid,
        in_specs=[
            pl.BlockSpec((block_b, obs_size), lambda i: (i, 0), memory_space=vmem),
            pl.BlockSpec((obs_size, hidden), lambda i: (0, 0), memory_space=vmem),
            pl.BlockSpec((1, hidden), lambda i: (0, 0), memory_space=vmem),
            pl.BlockSpec((hidden, a_pad), lambda i: (0, 0), memory_space=vmem),
            pl.BlockSpec((1, a_pad), lambda i: (0, 0), memory_space=vmem),
        ],
        out_specs=pl.BlockSpec((block_b, a_pad), lambda i: (i, 0),
                               memory_space=vmem),
        compiler_params=pltpu.CompilerParams(
            dimension_semantics=("parallel",),       # batch tiles independent
            vmem_limit_bytes=32 * 1024 * 1024,       # safe on v5e/v6e/v7x
        ),
        cost_estimate=cost,
    )(x, w1, b1, w2p, b2p)

    return out[:, :n_actions]


if __name__ == "__main__":
    # CartPole-like sizes; batch=300 exercises a multi-tile grid (2 tiles, so
    # both v7x TensorCores get work) with a ragged final tile (no x padding).
    batch, obs_size, hidden_size, n_actions = 300, 4, 128, 2

    key = jax.random.PRNGKey(0)
    kx, k1, k2, k3, k4 = jax.random.split(key, 5)

    # PyTorch-style (Kaiming-uniform-ish) f32 master parameters.
    bound1 = 1.0 / (obs_size ** 0.5)
    bound2 = 1.0 / (hidden_size ** 0.5)
    w1 = jax.random.uniform(k1, (obs_size, hidden_size), jnp.float32, -bound1, bound1)
    b1 = jax.random.uniform(k2, (1, hidden_size), jnp.float32, -bound1, bound1)
    w2 = jax.random.uniform(k3, (hidden_size, n_actions), jnp.float32, -bound2, bound2)
    b2 = jax.random.uniform(k4, (1, n_actions), jnp.float32, -bound2, bound2)

    x = jax.random.normal(kx, (batch, obs_size), jnp.float32)

    # One-time param prep (pad + bf16 cast) OUTSIDE the jitted forward.
    w1p, b1p, w2p, b2p = jax.block_until_ready(prepare_params(w1, b1, w2, b2))

    fwd = jax.jit(functools.partial(net_forward, n_actions=n_actions))
    out = jax.block_until_ready(fwd(x, w1p, b1p, w2p, b2p))

    # Pure-JAX reference on the same compute path: layer 1 in f32, layer 2
    # with bf16 weights / f32 accumulation.
    h_ref = jnp.maximum(
        jnp.dot(x, w1, preferred_element_type=jnp.float32) + b1, 0.0)
    ref = jnp.dot(h_ref.astype(jnp.bfloat16), w2.astype(jnp.bfloat16),
                  preferred_element_type=jnp.float32) + b2

    assert out.shape == (batch, n_actions)
    assert out.dtype == jnp.float32
    max_err = float(jnp.max(jnp.abs(out - ref)))
    assert jnp.allclose(out, ref, atol=1e-2, rtol=1e-2), max_err

    print("KERNEL_OK")
</pallas_src>

<mosaic_0001>
module attributes {stable_mosaic.version = 11 : i64} {
  func.func @mlp_kernel(%arg0: i32, %arg1: memref<296x4xf32, #tpu.memory_space<vmem>>, %arg2: memref<4x128xf32, #tpu.memory_space<vmem>>, %arg3: memref<1x128xf32, #tpu.memory_space<vmem>>, %arg4: memref<128x128xbf16, #tpu.memory_space<vmem>>, %arg5: memref<1x128xf32, #tpu.memory_space<vmem>>, %arg6: memref<296x128xf32, #tpu.memory_space<vmem>>) attributes {dimension_semantics = [#tpu.dimension_semantics<parallel>], iteration_bounds = array<i64: 2>, scalar_prefetch = 0 : i64, scratch_operands = 0 : i64, tpu.core_type = #tpu.core_type<tc>, window_params = [{transform_indices = @transform_0, window_bounds = array<i64: 296, 4>}, {pipeline_mode = #tpu.pipeline_mode<synchronous>, transform_indices = @transform_1, window_bounds = array<i64: 4, 128>}, {pipeline_mode = #tpu.pipeline_mode<synchronous>, transform_indices = @transform_2, window_bounds = array<i64: 1, 128>}, {pipeline_mode = #tpu.pipeline_mode<synchronous>, transform_indices = @transform_3, window_bounds = array<i64: 128, 128>}, {pipeline_mode = #tpu.pipeline_mode<synchronous>, transform_indices = @transform_4, window_bounds = array<i64: 1, 128>}, {transform_indices = @transform_5, window_bounds = array<i64: 296, 128>}]} {
    %c0 = arith.constant 0 : index
    %c0_0 = arith.constant 0 : index
    %0 = vector.load %arg1[%c0, %c0_0] : memref<296x4xf32, #tpu.memory_space<vmem>>, vector<296x4xf32>
    %c0_1 = arith.constant 0 : index
    %c0_2 = arith.constant 0 : index
    %1 = vector.load %arg2[%c0_1, %c0_2] : memref<4x128xf32, #tpu.memory_space<vmem>>, vector<4x128xf32>
    %c0_3 = arith.constant 0 : index
    %c0_4 = arith.constant 0 : index
    %2 = vector.load %arg3[%c0_3, %c0_4] : memref<1x128xf32, #tpu.memory_space<vmem>>, vector<1x128xf32>
    %3 = vector.extract_strided_slice %0 {offsets = [0, 0], sizes = [296, 1], strides = [1, 1]} : vector<296x4xf32> to vector<296x1xf32>
    %4 = vector.extract_strided_slice %1 {offsets = [0, 0], sizes = [1, 128], strides = [1, 1]} : vector<4x128xf32> to vector<1x128xf32>
    %5 = vector.broadcast %3 : vector<296x1xf32> to vector<296x128xf32>
    %6 = vector.broadcast %4 : vector<1x128xf32> to vector<296x128xf32>
    %7 = arith.mulf %5, %6 : vector<296x128xf32>
    %8 = vector.broadcast %2 : vector<1x128xf32> to vector<296x128xf32>
    %9 = arith.addf %8, %7 : vector<296x128xf32>
    %10 = vector.extract_strided_slice %0 {offsets = [0, 1], sizes = [296, 1], strides = [1, 1]} : vector<296x4xf32> to vector<296x1xf32>
    %11 = vector.extract_strided_slice %1 {offsets = [1, 0], sizes = [1, 128], strides = [1, 1]} : vector<4x128xf32> to vector<1x128xf32>
    %12 = vector.broadcast %10 : vector<296x1xf32> to vector<296x128xf32>
    %13 = vector.broadcast %11 : vector<1x128xf32> to vector<296x128xf32>
    %14 = arith.mulf %12, %13 : vector<296x128xf32>
    %15 = arith.addf %9, %14 : vector<296x128xf32>
    %16 = vector.extract_strided_slice %0 {offsets = [0, 2], sizes = [296, 1], strides = [1, 1]} : vector<296x4xf32> to vector<296x1xf32>
    %17 = vector.extract_strided_slice %1 {offsets = [2, 0], sizes = [1, 128], strides = [1, 1]} : vector<4x128xf32> to vector<1x128xf32>
    %18 = vector.broadcast %16 : vector<296x1xf32> to vector<296x128xf32>
    %19 = vector.broadcast %17 : vector<1x128xf32> to vector<296x128xf32>
    %20 = arith.mulf %18, %19 : vector<296x128xf32>
    %21 = arith.addf %15, %20 : vector<296x128xf32>
    %22 = vector.extract_strided_slice %0 {offsets = [0, 3], sizes = [296, 1], strides = [1, 1]} : vector<296x4xf32> to vector<296x1xf32>
    %23 = vector.extract_strided_slice %1 {offsets = [3, 0], sizes = [1, 128], strides = [1, 1]} : vector<4x128xf32> to vector<1x128xf32>
    %24 = vector.broadcast %22 : vector<296x1xf32> to vector<296x128xf32>
    %25 = vector.broadcast %23 : vector<1x128xf32> to vector<296x128xf32>
    %26 = arith.mulf %24, %25 : vector<296x128xf32>
    %27 = arith.addf %21, %26 : vector<296x128xf32>
    %cst = arith.constant 0.000000e+00 : f32
    %28 = vector.broadcast %cst : f32 to vector<296x128xf32>
    %29 = arith.maximumf %27, %28 : vector<296x128xf32>
    %30 = arith.truncf %29 : vector<296x128xf32> to vector<296x128xbf16>
    %c0_5 = arith.constant 0 : index
    %c0_6 = arith.constant 0 : index
    %31 = vector.load %arg4[%c0_5, %c0_6] : memref<128x128xbf16, #tpu.memory_space<vmem>>, vector<128x128xbf16>
    %cst_7 = arith.constant dense<0.000000e+00> : vector<296x128xf32>
    %32 = tpu.matmul %30, %31, %cst_7 {dimension_numbers = #tpu.dot_dimension_numbers<[1], [0], [0], [1], [0, 0, 1, 1], [], []>} : vector<296x128xbf16>, vector<128x128xbf16>, vector<296x128xf32> -> vector<296x128xf32>
    %c0_8 = arith.constant 0 : index
    %c0_9 = arith.constant 0 : index
    %33 = vector.load %arg5[%c0_8, %c0_9] : memref<1x128xf32, #tpu.memory_space<vmem>>, vector<1x128xf32>
    %34 = vector.broadcast %33 : vector<1x128xf32> to vector<296x128xf32>
    %35 = arith.addf %32, %34 : vector<296x128xf32>
    %c0_10 = arith.constant 0 : index
    %c0_11 = arith.constant 0 : index
    %36 = vector.load %arg6[%c0_10, %c0_11] : memref<296x128xf32, #tpu.memory_space<vmem>>, vector<296x128xf32>
    tpu.vector_store %arg6[%c0_10, %c0_11], %35 {strides = array<i32>} : memref<296x128xf32, #tpu.memory_space<vmem>>, vector<296x128xf32>,
    return
  }
  func.func @transform_0(%arg0: i32) -> (i32, i32) {
    %c0_i32 = arith.constant 0 : i32
    %c0_i32_0 = arith.constant 0 : i32
    return %arg0, %c0_i32 : i32, i32
  }
  func.func @transform_1(%arg0: i32) -> (i32, i32) {
    %c0_i32 = arith.constant 0 : i32
    %c0_i32_0 = arith.constant 0 : i32
    %c0_i32_1 = arith.constant 0 : i32
    return %c0_i32, %c0_i32_0 : i32, i32
  }
  func.func @transform_2(%arg0: i32) -> (i32, i32) {
    %c0_i32 = arith.constant 0 : i32
    %c0_i32_0 = arith.constant 0 : i32
    %c0_i32_1 = arith.constant 0 : i32
    return %c0_i32, %c0_i32_0 : i32, i32
  }
  func.func @transform_3(%arg0: i32) -> (i32, i32) {
    %c0_i32 = arith.constant 0 : i32
    %c0_i32_0 = arith.constant 0 : i32
    %c0_i32_1 = arith.constant 0 : i32
    return %c0_i32, %c0_i32_0 : i32, i32
  }
  func.func @transform_4(%arg0: i32) -> (i32, i32) {
    %c0_i32 = arith.constant 0 : i32
    %c0_i32_0 = arith.constant 0 : i32
    %c0_i32_1 = arith.constant 0 : i32
    return %c0_i32, %c0_i32_0 : i32, i32
  }
  func.func @transform_5(%arg0: i32) -> (i32, i32) {
    %c0_i32 = arith.constant 0 : i32
    %c0_i32_0 = arith.constant 0 : i32
    return %arg0, %c0_i32 : i32, i32
  }
}

</mosaic_0001>

<llo_original>
// kernel: net_forward.1
$region0: #{net_forward.1}
  #allocation0 [shape = 'u32[]', space=smem, size = 0x4, offset = 0x4, fixed_abs, tag = 'smem constant byte address 0x4 - core index']
  #allocation1 [shape = 'u32[144,128]{1,0:T(1,128)}', space=vmem, size = 0x12000, scoped, tag = 'internal scratch']
  %s0 = inlined_call_operand.vmem [shape: f32[300,4], index: 0, kind: input, shape index: {}]
  %s1 = inlined_call_operand.vmem [shape: f32[4,128], index: 1, kind: input, shape index: {}]
  %s2 = inlined_call_operand.vmem [shape: f32[1,128], index: 2, kind: input, shape index: {}]
  %s3 = inlined_call_operand.vmem [shape: bf16[128,128], index: 3, kind: input, shape index: {}]
  %s4 = inlined_call_operand.vmem [shape: f32[1,128], index: 4, kind: input, shape index: {}]
  %s5 = inlined_call_operand.vmem [shape: f32[300,128], index: 5, kind: output, shape index: {}]
  %s6 = sld [smem:[#allocation0]]
  $region101: #{net_forward.1} parent=0
    _
  %s8 = ssub.s32 1, %s6
  %s9 = scalar_select 0, %s8, %s6
  $region1: #{net_forward.1} parent=0
    #allocation2 [shape = 'u8[303104]{0}', space=vmem, size = 0x4a000, scoped, tag = 'output window, operand 0']
    loop: start=0, step=1, limit=4
    $region2: #{net_forward.1} parent=1 // loop_pre_header
      _
    $region3: #{net_forward.1} parent=1 // loop_header
      %s11 = sphi 0, %s15
      %p12 = scmp.ge.s32.totalorder %s11, 4
      %s21 = sphi 0, %s23
      %s24 = sphi 0, %s21
      %s25 = sphi 0, %s24
      %s41 = sphi 0, %s25
      %s45 = sphi 0, %s45
      %s47 = sphi 0, %s45
      %s48 = sphi 0, %s47
      %s62 = sphi 0, %s48
      %s66 = sphi 0, %s66
      %s68 = sphi 0, %s66
      %s69 = sphi 0, %s68
      %s83 = sphi 0, %s69
      %s87 = sphi 0, %s87
      %s89 = sphi 0, %s87
      %s90 = sphi 0, %s89
      %s104 = sphi 0, %s90
      %s108 = sphi 0, %s108
      %s110 = sphi 0, %s108
      %s111 = sphi 0, %s110
      %s125 = sphi 0, %s111
      %s131 = sphi 0, %s133
      %s134 = sphi 0, %s131
      %s135 = sphi 0, %s134
      %s151 = sphi 0, %s135
    $region4: #{net_forward.1} parent=1 // loop_header_branch
      %14 = sbr.rel (%p12) target = $region8
    $region5: #{net_forward.1} parent=1 // loop_body
      %s16 = ssub.s32 %s11, 1
      %s17 = ssub.s32 %s11, 2
      %s18 = sadd.s32 %s11, 1
      %s19 = ssub.s32 %s11, %s18
      %p20 = scmp.eq.s32.totalorder %s19, 0
      %s22 = sadd.s32 %s21, 1
      %s23 = scalar_select %p20, %s21, %s22
      %p26 = pneg %p20
      %p27 = scmp.eq.s32.totalorder %s11, 1
      %p28 = por %p26, %p27
      %p29 = scmp.ne.s32.totalorder %s21, %s24
      %p30 = scmp.eq.s32.totalorder %s11, 0
      %p31 = por %p29, %p30
      %p32 = scmp.ne.s32.totalorder %s21, %s24
      %p33 = scmp.eq.s32.totalorder %s16, 1
      %p34 = por %p32, %p33
      %p35 = scmp.ne.s32.totalorder %s24, %s25
      %p36 = scmp.eq.s32.totalorder %s16, 0
      %p37 = por %p35, %p36
      %p38 = scmp.ne.s32.totalorder %s24, %s25
      %p39 = scmp.eq.s32.totalorder %s17, 1
      %p40 = por %p38, %p39
      %p42 = scmp.ne.s32.totalorder %s25, %s41
      %p43 = scmp.eq.s32.totalorder %s17, 0
      %p44 = por %p42, %p43
      %s46 = sadd.s32 %s45, 1
      %p49 = scmp.eq.s32.totalorder %s11, 1
      %p50 = scmp.ne.s32.totalorder %s45, %s47
      %p51 = scmp.eq.s32.totalorder %s11, 0
      %p52 = por %p50, %p51
      %p53 = scmp.ne.s32.totalorder %s45, %s47
      %p54 = scmp.eq.s32.totalorder %s16, 1
      %p55 = por %p53, %p54
      %p56 = scmp.ne.s32.totalorder %s47, %s48
      %p57 = scmp.eq.s32.totalorder %s16, 0
      %p58 = por %p56, %p57
      %p59 = scmp.ne.s32.totalorder %s47, %s48
      %p60 = scmp.eq.s32.totalorder %s17, 1
      %p61 = por %p59, %p60
      %p63 = scmp.ne.s32.totalorder %s48, %s62
      %p64 = scmp.eq.s32.totalorder %s17, 0
      %p65 = por %p63, %p64
      %s67 = sadd.s32 %s66, 1
      %p70 = scmp.eq.s32.totalorder %s11, 1
      %p71 = scmp.ne.s32.totalorder %s66, %s68
      %p72 = scmp.eq.s32.totalorder %s11, 0
      %p73 = por %p71, %p72
      %p74 = scmp.ne.s32.totalorder %s66, %s68
      %p75 = scmp.eq.s32.totalorder %s16, 1
      %p76 = por %p74, %p75
      %p77 = scmp.ne.s32.totalorder %s68, %s69
      %p78 = scmp.eq.s32.totalorder %s16, 0
      %p79 = por %p77, %p78
      %p80 = scmp.ne.s32.totalorder %s68, %s69
      %p81 = scmp.eq.s32.totalorder %s17, 1
      %p82 = por %p80, %p81
      %p84 = scmp.ne.s32.totalorder %s69, %s83
      %p85 = scmp.eq.s32.totalorder %s17, 0
      %p86 = por %p84, %p85
      %s88 = sadd.s32 %s87, 1
      %p91 = scmp.eq.s32.totalorder %s11, 1
      %p92 = scmp.ne.s32.totalorder %s87, %s89
      %p93 = scmp.eq.s32.totalorder %s11, 0
      %p94 = por %p92, %p93
      %p95 = scmp.ne.s32.totalorder %s87, %s89
      %p96 = scmp.eq.s32.totalorder %s16, 1
      %p97 = por %p95, %p96
      %p98 = scmp.ne.s32.totalorder %s89, %s90
      %p99 = scmp.eq.s32.totalorder %s16, 0
      %p100 = por %p98, %p99
      %p101 = scmp.ne.s32.totalorder %s89, %s90
      %p102 = scmp.eq.s32.totalorder %s17, 1
      %p103 = por %p101, %p102
      %p105 = scmp.ne.s32.totalorder %s90, %s104
      %p106 = scmp.eq.s32.totalorder %s17, 0
      %p107 = por %p105, %p106
      %s109 = sadd.s32 %s108, 1
      %p112 = scmp.eq.s32.totalorder %s11, 1
      %p113 = scmp.ne.s32.totalorder %s108, %s110
      %p114 = scmp.eq.s32.totalorder %s11, 0
      %p115 = por %p113, %p114
      %p116 = scmp.ne.s32.totalorder %s108, %s110
      %p117 = scmp.eq.s32.totalorder %s16, 1
      %p118 = por %p116, %p117
      %p119 = scmp.ne.s32.totalorder %s110, %s111
      %p120 = scmp.eq.s32.totalorder %s16, 0
      %p121 = por %p119, %p120
      %p122 = scmp.ne.s32.totalorder %s110, %s111
      %p123 = scmp.eq.s32.totalorder %s17, 1
      %p124 = por %p122, %p123
      %p126 = scmp.ne.s32.totalorder %s111, %s125
      %p127 = scmp.eq.s32.totalorder %s17, 0
      %p128 = por %p126, %p127
      %s129 = ssub.s32 %s11, %s18
      %p130 = scmp.eq.s32.totalorder %s129, 0
      %s132 = sadd.s32 %s131, 1
      %s133 = scalar_select %p130, %s131, %s132
      %p136 = pneg %p130
      %p137 = scmp.eq.s32.totalorder %s11, 1
      %p138 = por %p136, %p137
      %p139 = scmp.ne.s32.totalorder %s131, %s134
      %p140 = scmp.eq.s32.totalorder %s11, 0
      %p141 = por %p139, %p140
      %p142 = scmp.ne.s32.totalorder %s131, %s134
      %p143 = scmp.eq.s32.totalorder %s16, 1
      %p144 = por %p142, %p143
      %p145 = scmp.ne.s32.totalorder %s134, %s135
      %p146 = scmp.eq.s32.totalorder %s16, 0
      %p147 = por %p145, %p146
      %p148 = scmp.ne.s32.totalorder %s134, %s135
      %p149 = scmp.eq.s32.totalorder %s17, 1
      %p150 = por %p148, %p149
      %p152 = scmp.ne.s32.totalorder %s135, %s151
      %p153 = scmp.eq.s32.totalorder %s17, 0
      %p154 = por %p152, %p153
      %p155 = scmp.le.s32.totalorder 1, %s11
      %p156 = scmp.lt.s32.totalorder %s11, 3
      %p157 = pnand %p155, %p156
      %p158 = pneg %p157
      // Predicated region
      $region9: #{net_forward.1} parent=5 // pred_check
        _
      $region10: #{net_forward.1} parent=5 // pred_check_branch
        %160 = sbr.rel (%p157) target = $region12
      $region11: #{net_forward.1} parent=5 // pred_region
        %s161 = ssub.s32 %s11, 1
        // Predicated region
        $region13: #{net_forward.1} parent=11 // pred_check
          %p162 = pneg %p58
        $region14: #{net_forward.1} parent=11 // pred_check_branch
          %164 = sbr.rel (%p162) target = $region16
        $region15: #{net_forward.1} parent=11 // pred_region
          _
        $region16: #{net_forward.1} parent=11 // pred_fallthru
          _
        // Predicated region
        $region17: #{net_forward.1} parent=11 // pred_check
          %p165 = pneg %p79
        $region18: #{net_forward.1} parent=11 // pred_check_branch
          %167 = sbr.rel (%p165) target = $region20
        $region19: #{net_forward.1} parent=11 // pred_region
          _
        $region20: #{net_forward.1} parent=11 // pred_fallthru
          _
        // Predicated region
        $region21: #{net_forward.1} parent=11 // pred_check
          %p168 = pneg %p100
        $region22: #{net_forward.1} parent=11 // pred_check_branch
          %170 = sbr.rel (%p168) target = $region24
        $region23: #{net_forward.1} parent=11 // pred_region
          _
        $region24: #{net_forward.1} parent=11 // pred_fallthru
          _
        // Predicated region
        $region25: #{net_forward.1} parent=11 // pred_check
          %p171 = pneg %p121
        $region26: #{net_forward.1} parent=11 // pred_check_branch
          %173 = sbr.rel (%p171) target = $region28
        $region27: #{net_forward.1} parent=11 // pred_region
          _
        $region28: #{net_forward.1} parent=11 // pred_fallthru
          _
      $region12: #{net_forward.1} parent=5 // pred_fallthru
        _
      %p174 = scmp.lt.s32.totalorder %s11, 2
      // Predicated region
      $region29: #{net_forward.1} parent=5 // pred_check
        %p175 = pneg %p174
      $region30: #{net_forward.1} parent=5 // pred_check_branch
        %177 = sbr.rel (%p175) target = $region32
      $region31: #{net_forward.1} parent=5 // pred_region
        // Predicated region
        $region33: #{net_forward.1} parent=31 // pred_check
          %p178 = pneg %p31
        $region34: #{net_forward.1} parent=31 // pred_check_branch
          %180 = sbr.rel (%p178) target = $region36
        $region35: #{net_forward.1} parent=31 // pred_region
          %s181 = smul.u32 37, %s11
          %s182 = ssub.s32 38, %s181
          %p183 = scmp.lt.s32.totalorder %s182, 37
          %s184 = scalar_select %p183, %s182, 37
          %s185 = smul.u32 128, %s184
          %p186 = scmp.lt.s32.totalorder %s181, 37
          %s187 = scalar_select %p186, %s181, 37
          %s188 = smul.addr %s187, 8
          %s189 = scalar_lea.vmem %s0, %s188
          %s190 = smul.u32 37, %s11
          %s191 = ssub.s32 38, %s190
          %p192 = scmp.lt.s32.totalorder %s191, 37
          %s193 = scalar_select %p192, %s191, 37
          %s194 = smul.u32 128, %s193
        $region36: #{net_forward.1} parent=31 // pred_fallthru
          _
      $region32: #{net_forward.1} parent=5 // pred_fallthru
        _
      %p195 = scmp.le.s32.totalorder 1, %s11
      %p196 = scmp.lt.s32.totalorder %s11, 3
      %p197 = pnand %p195, %p196
      %p198 = pneg %p197
      // Predicated region
      $region37: #{net_forward.1} parent=5 // pred_check
        _
      $region38: #{net_forward.1} parent=5 // pred_check_branch
        %200 = sbr.rel (%p197) target = $region40
      $region39: #{net_forward.1} parent=5 // pred_region
        %s201 = ssub.s32 %s11, 1
        %s202 = smul.u32 37, %s16
        %s203 = ssub.s32 38, %s202
        %p204 = scmp.lt.s32.totalorder %s203, 37
        %s205 = scalar_select %p204, %s203, 37
        %s206 = smul.u32 128, %s205
        %p207 = scmp.lt.s32.totalorder %s202, 37
        %s208 = scalar_select %p207, %s202, 37
        %s209 = smul.addr %s208, 8
        %s210 = scalar_lea.vmem %s0, %s209
        %p211 = pneg %p37
        %p212 = pneg %p34
        %p213 = pneg %p58
        %p214 = pneg %p55
        %p215 = pneg %p79
        %p216 = pneg %p76
        %p217 = pneg %p100
        %p218 = pneg %p97
        %p219 = pneg %p121
        %p220 = pneg %p118
        %p221 = pneg %p147
        %p222 = pneg %p144
        %s223 = sand.u32 %s134, 1
        %s224 = sand.u32 %s134, 1
        %s225 = smul.addr %s224, 296
        %s226 = scalar_lea.vmem [#allocation2], %s225
        %s227 = smul.u32 37, %s16
        %s228 = ssub.s32 38, %s227
        %p229 = scmp.lt.s32.totalorder %s228, 37
        %s230 = scalar_select %p229, %s228, 37
        %s231 = smul.u32 128, %s230
        %p232 = scmp.lt.s32.totalorder %s227, 37
        %s233 = scalar_select %p232, %s227, 37
        %s234 = smul.addr %s233, 8
        %s235 = scalar_lea.vmem %s0, %s234
        %s236 = smul.u32 37, %s16
        %s237 = ssub.s32 38, %s236
        %p238 = scmp.lt.s32.totalorder %s237, 37
        %s239 = scalar_select %p238, %s237, 37
        %s240 = smul.u32 128, %s239
        %s241 = smul.u32 37, %s16
        %s242 = ssub.s32 38, %s241
        %p243 = scmp.lt.s32.totalorder %s242, 37
        %s244 = scalar_select %p243, %s242, 37
        %s245 = smul.u32 128, %s244
        %v247 = vld [vmem:[%s235] sm:$0xff]
        %v248 = vld [vmem:[%s235 + $0x8] sm:$0xff]
        %v249 = vld [vmem:[%s235 + $0x10] sm:$0xff]
        %v250 = vld [vmem:[%s235 + $0x18] sm:$0xff]
        %v251 = vld [vmem:[%s235 + $0x20] sm:$0xff]
        %v252 = vld [vmem:[%s235 + $0x28] sm:$0xff]
        %v253 = vld [vmem:[%s235 + $0x30] sm:$0xff]
        %v254 = vld [vmem:[%s235 + $0x38] sm:$0xff]
        %v255 = vld [vmem:[%s235 + $0x40] sm:$0xff]
        %v256 = vld [vmem:[%s235 + $0x48] sm:$0xff]
        %v257 = vld [vmem:[%s235 + $0x50] sm:$0xff]
        %v258 = vld [vmem:[%s235 + $0x58] sm:$0xff]
        %v259 = vld [vmem:[%s235 + $0x60] sm:$0xff]
        %v260 = vld [vmem:[%s235 + $0x68] sm:$0xff]
        %v261 = vld [vmem:[%s235 + $0x70] sm:$0xff]
        %v262 = vld [vmem:[%s235 + $0x78] sm:$0xff]
        %v263 = vld [vmem:[%s235 + $0x80] sm:$0xff]
        %v264 = vld [vmem:[%s235 + $0x88] sm:$0xff]
        %v265 = vld [vmem:[%s235 + $0x90] sm:$0xff]
        %v266 = vld [vmem:[%s235 + $0x98] sm:$0xff]
        %v267 = vld [vmem:[%s235 + $0xa0] sm:$0xff]
        %v268 = vld [vmem:[%s235 + $0xa8] sm:$0xff]
        %v269 = vld [vmem:[%s235 + $0xb0] sm:$0xff]
        %v270 = vld [vmem:[%s235 + $0xb8] sm:$0xff]
        %v271 = vld [vmem:[%s235 + $0xc0] sm:$0xff]
        %v272 = vld [vmem:[%s235 + $0xc8] sm:$0xff]
        %v273 = vld [vmem:[%s235 + $0xd0] sm:$0xff]
        %v274 = vld [vmem:[%s235 + $0xd8] sm:$0xff]
        %v275 = vld [vmem:[%s235 + $0xe0] sm:$0xff]
        %v276 = vld [vmem:[%s235 + $0xe8] sm:$0xff]
        %v277 = vld [vmem:[%s235 + $0xf0] sm:$0xff]
        %v278 = vld [vmem:[%s235 + $0xf8] sm:$0xff]
        %v279 = vld [vmem:[%s235 + $0x100] sm:$0xff]
        %v280 = vld [vmem:[%s235 + $0x108] sm:$0xff]
        %v281 = vld [vmem:[%s235 + $0x110] sm:$0xff]
        %v282 = vld [vmem:[%s235 + $0x118] sm:$0xff]
        %v283 = vld [vmem:[%s235 + $0x120] sm:$0xff]
        %v284 = vld [vmem:[%s1] sm:$0xf]
        %v285 = vld [vmem:[%s2] sm:$0x1]
        %287 = vset.pattern.permute.xlu0 0
        %288 = vperm.xlu0 %287, %v247
        %v289 = vpop.permute.xlu0 %288
        %292 = vset.pattern.permute.xlu0 0
        %293 = vperm.xlu0 %292, %v248
        %v294 = vpop.permute.xlu0 %293
        %297 = vset.pattern.permute.xlu0 0
        %298 = vperm.xlu0 %297, %v249
        %v299 = vpop.permute.xlu0 %298
        %302 = vset.pattern.permute.xlu0 0
        %303 = vperm.xlu0 %302, %v250
        %v304 = vpop.permute.xlu0 %303
        %307 = vset.pattern.permute.xlu0 0
        %308 = vperm.xlu0 %307, %v251
        %v309 = vpop.permute.xlu0 %308
        %312 = vset.pattern.permute.xlu0 0
        %313 = vperm.xlu0 %312, %v252
        %v314 = vpop.permute.xlu0 %313
        %317 = vset.pattern.permute.xlu0 0
        %318 = vperm.xlu0 %317, %v253
        %v319 = vpop.permute.xlu0 %318
        %322 = vset.pattern.permute.xlu0 0
        %323 = vperm.xlu0 %322, %v254
        %v324 = vpop.permute.xlu0 %323
        %327 = vset.pattern.permute.xlu0 0
        %328 = vperm.xlu0 %327, %v255
        %v329 = vpop.permute.xlu0 %328
        %332 = vset.pattern.permute.xlu0 0
        %333 = vperm.xlu0 %332, %v256
        %v334 = vpop.permute.xlu0 %333
        %337 = vset.pattern.permute.xlu0 0
        %338 = vperm.xlu0 %337, %v257
        %v339 = vpop.permute.xlu0 %338
        %342 = vset.pattern.permute.xlu0 0
        %343 = vperm.xlu0 %342, %v258
        %v344 = vpop.permute.xlu0 %343
        %347 = vset.pattern.permute.xlu0 0
        %348 = vperm.xlu0 %347, %v259
        %v349 = vpop.permute.xlu0 %348
        %352 = vset.pattern.permute.xlu0 0
        %353 = vperm.xlu0 %352, %v260
        %v354 = vpop.permute.xlu0 %353
        %357 = vset.pattern.permute.xlu0 0
        %358 = vperm.xlu0 %357, %v261
        %v359 = vpop.permute.xlu0 %358
        %362 = vset.pattern.permute.xlu0 0
        %363 = vperm.xlu0 %362, %v262
        %v364 = vpop.permute.xlu0 %363
        %367 = vset.pattern.permute.xlu0 0
        %368 = vperm.xlu0 %367, %v263
        %v369 = vpop.permute.xlu0 %368
        %372 = vset.pattern.permute.xlu0 0
        %373 = vperm.xlu0 %372, %v264
        %v374 = vpop.permute.xlu0 %373
        %377 = vset.pattern.permute.xlu0 0
        %378 = vperm.xlu0 %377, %v265
        %v379 = vpop.permute.xlu0 %378
        %382 = vset.pattern.permute.xlu0 0
        %383 = vperm.xlu0 %382, %v266
        %v384 = vpop.permute.xlu0 %383
        %387 = vset.pattern.permute.xlu0 0
        %388 = vperm.xlu0 %387, %v267
        %v389 = vpop.permute.xlu0 %388
        %392 = vset.pattern.permute.xlu0 0
        %393 = vperm.xlu0 %392, %v268
        %v394 = vpop.permute.xlu0 %393
        %397 = vset.pattern.permute.xlu0 0
        %398 = vperm.xlu0 %397, %v269
        %v399 = vpop.permute.xlu0 %398
        %402 = vset.pattern.permute.xlu0 0
        %403 = vperm.xlu0 %402, %v270
        %v404 = vpop.permute.xlu0 %403
        %407 = vset.pattern.permute.xlu0 0
        %408 = vperm.xlu0 %407, %v271
        %v409 = vpop.permute.xlu0 %408
        %412 = vset.pattern.permute.xlu0 0
        %413 = vperm.xlu0 %412, %v272
        %v414 = vpop.permute.xlu0 %413
        %417 = vset.pattern.permute.xlu0 0
        %418 = vperm.xlu0 %417, %v273
        %v419 = vpop.permute.xlu0 %418
        %422 = vset.pattern.permute.xlu0 0
        %423 = vperm.xlu0 %422, %v274
        %v424 = vpop.permute.xlu0 %423
        %427 = vset.pattern.permute.xlu0 0
        %428 = vperm.xlu0 %427, %v275
        %v429 = vpop.permute.xlu0 %428
        %432 = vset.pattern.permute.xlu0 0
        %433 = vperm.xlu0 %432, %v276
        %v434 = vpop.permute.xlu0 %433
        %437 = vset.pattern.permute.xlu0 0
        %438 = vperm.xlu0 %437, %v277
        %v439 = vpop.permute.xlu0 %438
        %442 = vset.pattern.permute.xlu0 0
        %443 = vperm.xlu0 %442, %v278
        %v444 = vpop.permute.xlu0 %443
        %447 = vset.pattern.permute.xlu0 0
        %448 = vperm.xlu0 %447, %v279
        %v449 = vpop.permute.xlu0 %448
        %452 = vset.pattern.permute.xlu0 0
        %453 = vperm.xlu0 %452, %v280
        %v454 = vpop.permute.xlu0 %453
        %457 = vset.pattern.permute.xlu0 0
        %458 = vperm.xlu0 %457, %v281
        %v459 = vpop.permute.xlu0 %458
        %462 = vset.pattern.permute.xlu0 0
        %463 = vperm.xlu0 %462, %v282
        %v464 = vpop.permute.xlu0 %463
        %467 = vset.pattern.permute.xlu0 0
        %468 = vperm.xlu0 %467, %v283
        %v469 = vpop.permute.xlu0 %468
        %v471 = vlaneseq
        %v472 = vshrl.u32 %v471, 7
        %v473 = vsub.s32 0, %v472
        %v474 = vrot.slane %v284, %v473
        %v475 = vmul.f32 %v289, %v474
        %v476 = vmul.f32 %v294, %v474
        %v477 = vmul.f32 %v299, %v474
        %v478 = vmul.f32 %v304, %v474
        %v479 = vmul.f32 %v309, %v474
        %v480 = vmul.f32 %v314, %v474
        %v481 = vmul.f32 %v319, %v474
        %v482 = vmul.f32 %v324, %v474
        %v483 = vmul.f32 %v329, %v474
        %v484 = vmul.f32 %v334, %v474
        %v485 = vmul.f32 %v339, %v474
        %v486 = vmul.f32 %v344, %v474
        %v487 = vmul.f32 %v349, %v474
        %v488 = vmul.f32 %v354, %v474
        %v489 = vmul.f32 %v359, %v474
        %v490 = vmul.f32 %v364, %v474
        %v491 = vmul.f32 %v369, %v474
        %v492 = vmul.f32 %v374, %v474
        %v493 = vmul.f32 %v379, %v474
        %v494 = vmul.f32 %v384, %v474
        %v495 = vmul.f32 %v389, %v474
        %v496 = vmul.f32 %v394, %v474
        %v497 = vmul.f32 %v399, %v474
        %v498 = vmul.f32 %v404, %v474
        %v499 = vmul.f32 %v409, %v474
        %v500 = vmul.f32 %v414, %v474
        %v501 = vmul.f32 %v419, %v474
        %v502 = vmul.f32 %v424, %v474
        %v503 = vmul.f32 %v429, %v474
        %v504 = vmul.f32 %v434, %v474
        %v505 = vmul.f32 %v439, %v474
        %v506 = vmul.f32 %v444, %v474
        %v507 = vmul.f32 %v449, %v474
        %v508 = vmul.f32 %v454, %v474
        %v509 = vmul.f32 %v459, %v474
        %v510 = vmul.f32 %v464, %v474
        %v511 = vmul.f32 %v469, %v474
        %v513 = vlaneseq
        %v514 = vshrl.u32 %v513, 7
        %v515 = vsub.s32 0, %v514
        %v516 = vrot.slane %v285, %v515
        %v518 = vadd.f32 %v516, %v475
        %v519 = vadd.f32 %v516, %v476
        %v520 = vadd.f32 %v516, %v477
        %v521 = vadd.f32 %v516, %v478
        %v522 = vadd.f32 %v516, %v479
        %v523 = vadd.f32 %v516, %v480
        %v524 = vadd.f32 %v516, %v481
        %v525 = vadd.f32 %v516, %v482
        %v526 = vadd.f32 %v516, %v483
        %v527 = vadd.f32 %v516, %v484
        %v528 = vadd.f32 %v516, %v485
        %v529 = vadd.f32 %v516, %v486
        %v530 = vadd.f32 %v516, %v487
        %v531 = vadd.f32 %v516, %v488
        %v532 = vadd.f32 %v516, %v489
        %v533 = vadd.f32 %v516, %v490
        %v534 = vadd.f32 %v516, %v491
        %v535 = vadd.f32 %v516, %v492
        %v536 = vadd.f32 %v516, %v493
        %v537 = vadd.f32 %v516, %v494
        %v538 = vadd.f32 %v516, %v495
        %v539 = vadd.f32 %v516, %v496
        %v540 = vadd.f32 %v516, %v497
        %v541 = vadd.f32 %v516, %v498
        %v542 = vadd.f32 %v516, %v499
        %v543 = vadd.f32 %v516, %v500
        %v544 = vadd.f32 %v516, %v501
        %v545 = vadd.f32 %v516, %v502
        %v546 = vadd.f32 %v516, %v503
        %v547 = vadd.f32 %v516, %v504
        %v548 = vadd.f32 %v516, %v505
        %v549 = vadd.f32 %v516, %v506
        %v550 = vadd.f32 %v516, %v507
        %v551 = vadd.f32 %v516, %v508
        %v552 = vadd.f32 %v516, %v509
        %v553 = vadd.f32 %v516, %v510
        %v554 = vadd.f32 %v516, %v511
        %555 = vset.pattern.permute.xlu0 1
        %556 = vperm.xlu0 %555, %v247
        %v557 = vpop.permute.xlu0 %556
        %559 = vset.pattern.permute.xlu0 1
        %560 = vperm.xlu0 %559, %v248
        %v561 = vpop.permute.xlu0 %560
        %563 = vset.pattern.permute.xlu0 1
        %564 = vperm.xlu0 %563, %v249
        %v565 = vpop.permute.xlu0 %564
        %567 = vset.pattern.permute.xlu0 1
        %568 = vperm.xlu0 %567, %v250
        %v569 = vpop.permute.xlu0 %568
        %571 = vset.pattern.permute.xlu0 1
        %572 = vperm.xlu0 %571, %v251
        %v573 = vpop.permute.xlu0 %572
        %575 = vset.pattern.permute.xlu0 1
        %576 = vperm.xlu0 %575, %v252
        %v577 = vpop.permute.xlu0 %576
        %579 = vset.pattern.permute.xlu0 1
        %580 = vperm.xlu0 %579, %v253
        %v581 = vpop.permute.xlu0 %580
        %583 = vset.pattern.permute.xlu0 1
        %584 = vperm.xlu0 %583, %v254
        %v585 = vpop.permute.xlu0 %584
        %587 = vset.pattern.permute.xlu0 1
        %588 = vperm.xlu0 %587, %v255
        %v589 = vpop.permute.xlu0 %588
        %591 = vset.pattern.permute.xlu0 1
        %592 = vperm.xlu0 %591, %v256
        %v593 = vpop.permute.xlu0 %592
        %595 = vset.pattern.permute.xlu0 1
        %596 = vperm.xlu0 %595, %v257
        %v597 = vpop.permute.xlu0 %596
        %599 = vset.pattern.permute.xlu0 1
        %600 = vperm.xlu0 %599, %v258
        %v601 = vpop.permute.xlu0 %600
        %603 = vset.pattern.permute.xlu0 1
        %604 = vperm.xlu0 %603, %v259
        %v605 = vpop.permute.xlu0 %604
        %607 = vset.pattern.permute.xlu0 1
        %608 = vperm.xlu0 %607, %v260
        %v609 = vpop.permute.xlu0 %608
        %611 = vset.pattern.permute.xlu0 1
        %612 = vperm.xlu0 %611, %v261
        %v613 = vpop.permute.xlu0 %612
        %615 = vset.pattern.permute.xlu0 1
        %616 = vperm.xlu0 %615, %v262
        %v617 = vpop.permute.xlu0 %616
        %619 = vset.pattern.permute.xlu0 1
        %620 = vperm.xlu0 %619, %v263
        %v621 = vpop.permute.xlu0 %620
        %623 = vset.pattern.permute.xlu0 1
        %624 = vperm.xlu0 %623, %v264
        %v625 = vpop.permute.xlu0 %624
        %627 = vset.pattern.permute.xlu0 1
        %628 = vperm.xlu0 %627, %v265
        %v629 = vpop.permute.xlu0 %628
        %631 = vset.pattern.permute.xlu0 1
        %632 = vperm.xlu0 %631, %v266
        %v633 = vpop.permute.xlu0 %632
        %635 = vset.pattern.permute.xlu0 1
        %636 = vperm.xlu0 %635, %v267
        %v637 = vpop.permute.xlu0 %636
        %639 = vset.pattern.permute.xlu0 1
        %640 = vperm.xlu0 %639, %v268
        %v641 = vpop.permute.xlu0 %640
        %643 = vset.pattern.permute.xlu0 1
        %644 = vperm.xlu0 %643, %v269
        %v645 = vpop.permute.xlu0 %644
        %647 = vset.pattern.permute.xlu0 1
        %648 = vperm.xlu0 %647, %v270
        %v649 = vpop.permute.xlu0 %648
        %651 = vset.pattern.permute.xlu0 1
        %652 = vperm.xlu0 %651, %v271
        %v653 = vpop.permute.xlu0 %652
        %655 = vset.pattern.permute.xlu0 1
        %656 = vperm.xlu0 %655, %v272
        %v657 = vpop.permute.xlu0 %656
        %659 = vset.pattern.permute.xlu0 1
        %660 = vperm.xlu0 %659, %v273
        %v661 = vpop.permute.xlu0 %660
        %663 = vset.pattern.permute.xlu0 1
        %664 = vperm.xlu0 %663, %v274
        %v665 = vpop.permute.xlu0 %664
        %667 = vset.pattern.permute.xlu0 1
        %668 = vperm.xlu0 %667, %v275
        %v669 = vpop.permute.xlu0 %668
        %671 = vset.pattern.permute.xlu0 1
        %672 = vperm.xlu0 %671, %v276
        %v673 = vpop.permute.xlu0 %672
        %675 = vset.pattern.permute.xlu0 1
        %676 = vperm.xlu0 %675, %v277
        %v677 = vpop.permute.xlu0 %676
        %679 = vset.pattern.permute.xlu0 1
        %680 = vperm.xlu0 %679, %v278
        %v681 = vpop.permute.xlu0 %680
        %683 = vset.pattern.permute.xlu0 1
        %684 = vperm.xlu0 %683, %v279
        %v685 = vpop.permute.xlu0 %684
        %687 = vset.pattern.permute.xlu0 1
        %688 = vperm.xlu0 %687, %v280
        %v689 = vpop.permute.xlu0 %688
        %691 = vset.pattern.permute.xlu0 1
        %692 = vperm.xlu0 %691, %v281
        %v693 = vpop.permute.xlu0 %692
        %695 = vset.pattern.permute.xlu0 1
        %696 = vperm.xlu0 %695, %v282
        %v697 = vpop.permute.xlu0 %696
        %699 = vset.pattern.permute.xlu0 1
        %700 = vperm.xlu0 %699, %v283
        %v701 = vpop.permute.xlu0 %700
        %v703 = vlaneseq
        %v704 = vshrl.u32 %v703, 7
        %v705 = vsub.s32 1, %v704
        %v706 = vrot.slane %v284, %v705
        %v707 = vmul.f32 %v557, %v706
        %v708 = vmul.f32 %v561, %v706
        %v709 = vmul.f32 %v565, %v706
        %v710 = vmul.f32 %v569, %v706
        %v711 = vmul.f32 %v573, %v706
        %v712 = vmul.f32 %v577, %v706
        %v713 = vmul.f32 %v581, %v706
        %v714 = vmul.f32 %v585, %v706
        %v715 = vmul.f32 %v589, %v706
        %v716 = vmul.f32 %v593, %v706
        %v717 = vmul.f32 %v597, %v706
        %v718 = vmul.f32 %v601, %v706
        %v719 = vmul.f32 %v605, %v706
        %v720 = vmul.f32 %v609, %v706
        %v721 = vmul.f32 %v613, %v706
        %v722 = vmul.f32 %v617, %v706
        %v723 = vmul.f32 %v621, %v706
        %v724 = vmul.f32 %v625, %v706
        %v725 = vmul.f32 %v629, %v706
        %v726 = vmul.f32 %v633, %v706
        %v727 = vmul.f32 %v637, %v706
        %v728 = vmul.f32 %v641, %v706
        %v729 = vmul.f32 %v645, %v706
        %v730 = vmul.f32 %v649, %v706
        %v731 = vmul.f32 %v653, %v706
        %v732 = vmul.f32 %v657, %v706
        %v733 = vmul.f32 %v661, %v706
        %v734 = vmul.f32 %v665, %v706
        %v735 = vmul.f32 %v669, %v706
        %v736 = vmul.f32 %v673, %v706
        %v737 = vmul.f32 %v677, %v706
        %v738 = vmul.f32 %v681, %v706
        %v739 = vmul.f32 %v685, %v706
        %v740 = vmul.f32 %v689, %v706
        %v741 = vmul.f32 %v693, %v706
        %v742 = vmul.f32 %v697, %v706
        %v743 = vmul.f32 %v701, %v706
        %v744 = vadd.f32 %v518, %v707
        %v745 = vadd.f32 %v519, %v708
        %v746 = vadd.f32 %v520, %v709
        %v747 = vadd.f32 %v521, %v710
        %v748 = vadd.f32 %v522, %v711
        %v749 = vadd.f32 %v523, %v712
        %v750 = vadd.f32 %v524, %v713
        %v751 = vadd.f32 %v525, %v714
        %v752 = vadd.f32 %v526, %v715
        %v753 = vadd.f32 %v527, %v716
        %v754 = vadd.f32 %v528, %v717
        %v755 = vadd.f32 %v529, %v718
        %v756 = vadd.f32 %v530, %v719
        %v757 = vadd.f32 %v531, %v720
        %v758 = vadd.f32 %v532, %v721
        %v759 = vadd.f32 %v533, %v722
        %v760 = vadd.f32 %v534, %v723
        %v761 = vadd.f32 %v535, %v724
        %v762 = vadd.f32 %v536, %v725
        %v763 = vadd.f32 %v537, %v726
        %v764 = vadd.f32 %v538, %v727
        %v765 = vadd.f32 %v539, %v728
        %v766 = vadd.f32 %v540, %v729
        %v767 = vadd.f32 %v541, %v730
        %v768 = vadd.f32 %v542, %v731
        %v769 = vadd.f32 %v543, %v732
        %v770 = vadd.f32 %v544, %v733
        %v771 = vadd.f32 %v545, %v734
        %v772 = vadd.f32 %v546, %v735
        %v773 = vadd.f32 %v547, %v736
        %v774 = vadd.f32 %v548, %v737
        %v775 = vadd.f32 %v549, %v738
        %v776 = vadd.f32 %v550, %v739
        %v777 = vadd.f32 %v551, %v740
        %v778 = vadd.f32 %v552, %v741
        %v779 = vadd.f32 %v553, %v742
        %v780 = vadd.f32 %v554, %v743
        %781 = vset.pattern.permute.xlu0 2
        %782 = vperm.xlu0 %781, %v247
        %v783 = vpop.permute.xlu0 %782
        %785 = vset.pattern.permute.xlu0 2
        %786 = vperm.xlu0 %785, %v248
        %v787 = vpop.permute.xlu0 %786
        %789 = vset.pattern.permute.xlu0 2
        %790 = vperm.xlu0 %789, %v249
        %v791 = vpop.permute.xlu0 %790
        %793 = vset.pattern.permute.xlu0 2
        %794 = vperm.xlu0 %793, %v250
        %v795 = vpop.permute.xlu0 %794
        %797 = vset.pattern.permute.xlu0 2
        %798 = vperm.xlu0 %797, %v251
        %v799 = vpop.permute.xlu0 %798
        %801 = vset.pattern.permute.xlu0 2
        %802 = vperm.xlu0 %801, %v252
        %v803 = vpop.permute.xlu0 %802
        %805 = vset.pattern.permute.xlu0 2
        %806 = vperm.xlu0 %805, %v253
        %v807 = vpop.permute.xlu0 %806
        %809 = vset.pattern.permute.xlu0 2
        %810 = vperm.xlu0 %809, %v254
        %v811 = vpop.permute.xlu0 %810
        %813 = vset.pattern.permute.xlu0 2
        %814 = vperm.xlu0 %813, %v255
        %v815 = vpop.permute.xlu0 %814
        %817 = vset.pattern.permute.xlu0 2
        %818 = vperm.xlu0 %817, %v256
        %v819 = vpop.permute.xlu0 %818
        %821 = vset.pattern.permute.xlu0 2
        %822 = vperm.xlu0 %821, %v257
        %v823 = vpop.permute.xlu0 %822
        %825 = vset.pattern.permute.xlu0 2
        %826 = vperm.xlu0 %825, %v258
        %v827 = vpop.permute.xlu0 %826
        %829 = vset.pattern.permute.xlu0 2
        %830 = vperm.xlu0 %829, %v259
        %v831 = vpop.permute.xlu0 %830
        %833 = vset.pattern.permute.xlu0 2
        %834 = vperm.xlu0 %833, %v260
        %v835 = vpop.permute.xlu0 %834
        %837 = vset.pattern.permute.xlu0 2
        %838 = vperm.xlu0 %837, %v261
        %v839 = vpop.permute.xlu0 %838
        %841 = vset.pattern.permute.xlu0 2
        %842 = vperm.xlu0 %841, %v262
        %v843 = vpop.permute.xlu0 %842
        %845 = vset.pattern.permute.xlu0 2
        %846 = vperm.xlu0 %845, %v263
        %v847 = vpop.permute.xlu0 %846
        %849 = vset.pattern.permute.xlu0 2
        %850 = vperm.xlu0 %849, %v264
        %v851 = vpop.permute.xlu0 %850
        %853 = vset.pattern.permute.xlu0 2
        %854 = vperm.xlu0 %853, %v265
        %v855 = vpop.permute.xlu0 %854
        %857 = vset.pattern.permute.xlu0 2
        %858 = vperm.xlu0 %857, %v266
        %v859 = vpop.permute.xlu0 %858
        %861 = vset.pattern.permute.xlu0 2
        %862 = vperm.xlu0 %861, %v267
        %v863 = vpop.permute.xlu0 %862
        %865 = vset.pattern.permute.xlu0 2
        %866 = vperm.xlu0 %865, %v268
        %v867 = vpop.permute.xlu0 %866
        %869 = vset.pattern.permute.xlu0 2
        %870 = vperm.xlu0 %869, %v269
        %v871 = vpop.permute.xlu0 %870
        %873 = vset.pattern.permute.xlu0 2
        %874 = vperm.xlu0 %873, %v270
        %v875 = vpop.permute.xlu0 %874
        %877 = vset.pattern.permute.xlu0 2
        %878 = vperm.xlu0 %877, %v271
        %v879 = vpop.permute.xlu0 %878
        %881 = vset.pattern.permute.xlu0 2
        %882 = vperm.xlu0 %881, %v272
        %v883 = vpop.permute.xlu0 %882
        %885 = vset.pattern.permute.xlu0 2
        %886 = vperm.xlu0 %885, %v273
        %v887 = vpop.permute.xlu0 %886
        %889 = vset.pattern.permute.xlu0 2
        %890 = vperm.xlu0 %889, %v274
        %v891 = vpop.permute.xlu0 %890
        %893 = vset.pattern.permute.xlu0 2
        %894 = vperm.xlu0 %893, %v275
        %v895 = vpop.permute.xlu0 %894
        %897 = vset.pattern.permute.xlu0 2
        %898 = vperm.xlu0 %897, %v276
        %v899 = vpop.permute.xlu0 %898
        %901 = vset.pattern.permute.xlu0 2
        %902 = vperm.xlu0 %901, %v277
        %v903 = vpop.permute.xlu0 %902
        %905 = vset.pattern.permute.xlu0 2
        %906 = vperm.xlu0 %905, %v278
        %v907 = vpop.permute.xlu0 %906
        %909 = vset.pattern.permute.xlu0 2
        %910 = vperm.xlu0 %909, %v279
        %v911 = vpop.permute.xlu0 %910
        %913 = vset.pattern.permute.xlu0 2
        %914 = vperm.xlu0 %913, %v280
        %v915 = vpop.permute.xlu0 %914
        %917 = vset.pattern.permute.xlu0 2
        %918 = vperm.xlu0 %917, %v281
        %v919 = vpop.permute.xlu0 %918
        %921 = vset.pattern.permute.xlu0 2
        %922 = vperm.xlu0 %921, %v282
        %v923 = vpop.permute.xlu0 %922
        %925 = vset.pattern.permute.xlu0 2
        %926 = vperm.xlu0 %925, %v283
        %v927 = vpop.permute.xlu0 %926
        %v929 = vlaneseq
        %v930 = vshrl.u32 %v929, 7
        %v931 = vsub.s32 2, %v930
        %v932 = vrot.slane %v284, %v931
        %v933 = vmul.f32 %v783, %v932
        %v934 = vmul.f32 %v787, %v932
        %v935 = vmul.f32 %v791, %v932
        %v936 = vmul.f32 %v795, %v932
        %v937 = vmul.f32 %v799, %v932
        %v938 = vmul.f32 %v803, %v932
        %v939 = vmul.f32 %v807, %v932
        %v940 = vmul.f32 %v811, %v932
        %v941 = vmul.f32 %v815, %v932
        %v942 = vmul.f32 %v819, %v932
        %v943 = vmul.f32 %v823, %v932
        %v944 = vmul.f32 %v827, %v932
        %v945 = vmul.f32 %v831, %v932
        %v946 = vmul.f32 %v835, %v932
        %v947 = vmul.f32 %v839, %v932
        %v948 = vmul.f32 %v843, %v932
        %v949 = vmul.f32 %v847, %v932
        %v950 = vmul.f32 %v851, %v932
        %v951 = vmul.f32 %v855, %v932
        %v952 = vmul.f32 %v859, %v932
        %v953 = vmul.f32 %v863, %v932
        %v954 = vmul.f32 %v867, %v932
        %v955 = vmul.f32 %v871, %v932
        %v956 = vmul.f32 %v875, %v932
        %v957 = vmul.f32 %v879, %v932
        %v958 = vmul.f32 %v883, %v932
        %v959 = vmul.f32 %v887, %v932
        %v960 = vmul.f32 %v891, %v932
        %v961 = vmul.f32 %v895, %v932
        %v962 = vmul.f32 %v899, %v932
        %v963 = vmul.f32 %v903, %v932
        %v964 = vmul.f32 %v907, %v932
        %v965 = vmul.f32 %v911, %v932
        %v966 = vmul.f32 %v915, %v932
        %v967 = vmul.f32 %v919, %v932
        %v968 = vmul.f32 %v923, %v932
        %v969 = vmul.f32 %v927, %v932
        %v970 = vadd.f32 %v744, %v933
        %v971 = vadd.f32 %v745, %v934
        %v972 = vadd.f32 %v746, %v935
        %v973 = vadd.f32 %v747, %v936
        %v974 = vadd.f32 %v748, %v937
        %v975 = vadd.f32 %v749, %v938
        %v976 = vadd.f32 %v750, %v939
        %v977 = vadd.f32 %v751, %v940
        %v978 = vadd.f32 %v752, %v941
        %v979 = vadd.f32 %v753, %v942
        %v980 = vadd.f32 %v754, %v943
        %v981 = vadd.f32 %v755, %v944
        %v982 = vadd.f32 %v756, %v945
        %v983 = vadd.f32 %v757, %v946
        %v984 = vadd.f32 %v758, %v947
        %v985 = vadd.f32 %v759, %v948
        %v986 = vadd.f32 %v760, %v949
        %v987 = vadd.f32 %v761, %v950
        %v988 = vadd.f32 %v762, %v951
        %v989 = vadd.f32 %v763, %v952
        %v990 = vadd.f32 %v764, %v953
        %v991 = vadd.f32 %v765, %v954
        %v992 = vadd.f32 %v766, %v955
        %v993 = vadd.f32 %v767, %v956
        %v994 = vadd.f32 %v768, %v957
        %v995 = vadd.f32 %v769, %v958
        %v996 = vadd.f32 %v770, %v959
        %v997 = vadd.f32 %v771, %v960
        %v998 = vadd.f32 %v772, %v961
        %v999 = vadd.f32 %v773, %v962
        %v1000 = vadd.f32 %v774, %v963
        %v1001 = vadd.f32 %v775, %v964
        %v1002 = vadd.f32 %v776, %v965
        %v1003 = vadd.f32 %v777, %v966
        %v1004 = vadd.f32 %v778, %v967
        %v1005 = vadd.f32 %v779, %v968
        %v1006 = vadd.f32 %v780, %v969
        %1007 = vset.pattern.permute.xlu0 3
        %1008 = vperm.xlu0 %1007, %v247
        %v1009 = vpop.permute.xlu0 %1008
        %1011 = vset.pattern.permute.xlu0 3
        %1012 = vperm.xlu0 %1011, %v248
        %v1013 = vpop.permute.xlu0 %1012
        %1015 = vset.pattern.permute.xlu0 3
        %1016 = vperm.xlu0 %1015, %v249
        %v1017 = vpop.permute.xlu0 %1016
        %1019 = vset.pattern.permute.xlu0 3
        %1020 = vperm.xlu0 %1019, %v250
        %v1021 = vpop.permute.xlu0 %1020
        %1023 = vset.pattern.permute.xlu0 3
        %1024 = vperm.xlu0 %1023, %v251
        %v1025 = vpop.permute.xlu0 %1024
        %1027 = vset.pattern.permute.xlu0 3
        %1028 = vperm.xlu0 %1027, %v252
        %v1029 = vpop.permute.xlu0 %1028
        %1031 = vset.pattern.permute.xlu0 3
        %1032 = vperm.xlu0 %1031, %v253
        %v1033 = vpop.permute.xlu0 %1032
        %1035 = vset.pattern.permute.xlu0 3
        %1036 = vperm.xlu0 %1035, %v254
        %v1037 = vpop.permute.xlu0 %1036
        %1039 = vset.pattern.permute.xlu0 3
        %1040 = vperm.xlu0 %1039, %v255
        %v1041 = vpop.permute.xlu0 %1040
        %1043 = vset.pattern.permute.xlu0 3
        %1044 = vperm.xlu0 %1043, %v256
        %v1045 = vpop.permute.xlu0 %1044
        %1047 = vset.pattern.permute.xlu0 3
        %1048 = vperm.xlu0 %1047, %v257
        %v1049 = vpop.permute.xlu0 %1048
        %1051 = vset.pattern.permute.xlu0 3
        %1052 = vperm.xlu0 %1051, %v258
        %v1053 = vpop.permute.xlu0 %1052
        %1055 = vset.pattern.permute.xlu0 3
        %1056 = vperm.xlu0 %1055, %v259
        %v1057 = vpop.permute.xlu0 %1056
        %1059 = vset.pattern.permute.xlu0 3
        %1060 = vperm.xlu0 %1059, %v260
        %v1061 = vpop.permute.xlu0 %1060
        %1063 = vset.pattern.permute.xlu0 3
        %1064 = vperm.xlu0 %1063, %v261
        %v1065 = vpop.permute.xlu0 %1064
        %1067 = vset.pattern.permute.xlu0 3
        %1068 = vperm.xlu0 %1067, %v262
        %v1069 = vpop.permute.xlu0 %1068
        %1071 = vset.pattern.permute.xlu0 3
        %1072 = vperm.xlu0 %1071, %v263
        %v1073 = vpop.permute.xlu0 %1072
        %1075 = vset.pattern.permute.xlu0 3
        %1076 = vperm.xlu0 %1075, %v264
        %v1077 = vpop.permute.xlu0 %1076
        %1079 = vset.pattern.permute.xlu0 3
        %1080 = vperm.xlu0 %1079, %v265
        %v1081 = vpop.permute.xlu0 %1080
        %1083 = vset.pattern.permute.xlu0 3
        %1084 = vperm.xlu0 %1083, %v266
        %v1085 = vpop.permute.xlu0 %1084
        %1087 = vset.pattern.permute.xlu0 3
        %1088 = vperm.xlu0 %1087, %v267
        %v1089 = vpop.permute.xlu0 %1088
        %1091 = vset.pattern.permute.xlu0 3
        %1092 = vperm.xlu0 %1091, %v268
        %v1093 = vpop.permute.xlu0 %1092
        %1095 = vset.pattern.permute.xlu0 3
        %1096 = vperm.xlu0 %1095, %v269
        %v1097 = vpop.permute.xlu0 %1096
        %1099 = vset.pattern.permute.xlu0 3
        %1100 = vperm.xlu0 %1099, %v270
        %v1101 = vpop.permute.xlu0 %1100
        %1103 = vset.pattern.permute.xlu0 3
        %1104 = vperm.xlu0 %1103, %v271
        %v1105 = vpop.permute.xlu0 %1104
        %1107 = vset.pattern.permute.xlu0 3
        %1108 = vperm.xlu0 %1107, %v272
        %v1109 = vpop.permute.xlu0 %1108
        %1111 = vset.pattern.permute.xlu0 3
        %1112 = vperm.xlu0 %1111, %v273
        %v1113 = vpop.permute.xlu0 %1112
        %1115 = vset.pattern.permute.xlu0 3
        %1116 = vperm.xlu0 %1115, %v274
        %v1117 = vpop.permute.xlu0 %1116
        %1119 = vset.pattern.permute.xlu0 3
        %1120 = vperm.xlu0 %1119, %v275
        %v1121 = vpop.permute.xlu0 %1120
        %1123 = vset.pattern.permute.xlu0 3
        %1124 = vperm.xlu0 %1123, %v276
        %v1125 = vpop.permute.xlu0 %1124
        %1127 = vset.pattern.permute.xlu0 3
        %1128 = vperm.xlu0 %1127, %v277
        %v1129 = vpop.permute.xlu0 %1128
        %1131 = vset.pattern.permute.xlu0 3
        %1132 = vperm.xlu0 %1131, %v278
        %v1133 = vpop.permute.xlu0 %1132
        %1135 = vset.pattern.permute.xlu0 3
        %1136 = vperm.xlu0 %1135, %v279
        %v1137 = vpop.permute.xlu0 %1136
        %1139 = vset.pattern.permute.xlu0 3
        %1140 = vperm.xlu0 %1139, %v280
        %v1141 = vpop.permute.xlu0 %1140
        %1143 = vset.pattern.permute.xlu0 3
        %1144 = vperm.xlu0 %1143, %v281
        %v1145 = vpop.permute.xlu0 %1144
        %1147 = vset.pattern.permute.xlu0 3
        %1148 = vperm.xlu0 %1147, %v282
        %v1149 = vpop.permute.xlu0 %1148
        %1151 = vset.pattern.permute.xlu0 3
        %1152 = vperm.xlu0 %1151, %v283
        %v1153 = vpop.permute.xlu0 %1152
        %v1155 = vlaneseq
        %v1156 = vshrl.u32 %v1155, 7
        %v1157 = vsub.s32 3, %v1156
        %v1158 = vrot.slane %v284, %v1157
        %v1159 = vmul.f32 %v1009, %v1158
        %v1160 = vmul.f32 %v1013, %v1158
        %v1161 = vmul.f32 %v1017, %v1158
        %v1162 = vmul.f32 %v1021, %v1158
        %v1163 = vmul.f32 %v1025, %v1158
        %v1164 = vmul.f32 %v1029, %v1158
        %v1165 = vmul.f32 %v1033, %v1158
        %v1166 = vmul.f32 %v1037, %v1158
        %v1167 = vmul.f32 %v1041, %v1158
        %v1168 = vmul.f32 %v1045, %v1158
        %v1169 = vmul.f32 %v1049, %v1158
        %v1170 = vmul.f32 %v1053, %v1158
        %v1171 = vmul.f32 %v1057, %v1158
        %v1172 = vmul.f32 %v1061, %v1158
        %v1173 = vmul.f32 %v1065, %v1158
        %v1174 = vmul.f32 %v1069, %v1158
        %v1175 = vmul.f32 %v1073, %v1158
        %v1176 = vmul.f32 %v1077, %v1158
        %v1177 = vmul.f32 %v1081, %v1158
        %v1178 = vmul.f32 %v1085, %v1158
        %v1179 = vmul.f32 %v1089, %v1158
        %v1180 = vmul.f32 %v1093, %v1158
        %v1181 = vmul.f32 %v1097, %v1158
        %v1182 = vmul.f32 %v1101, %v1158
        %v1183 = vmul.f32 %v1105, %v1158
        %v1184 = vmul.f32 %v1109, %v1158
        %v1185 = vmul.f32 %v1113, %v1158
        %v1186 = vmul.f32 %v1117, %v1158
        %v1187 = vmul.f32 %v1121, %v1158
        %v1188 = vmul.f32 %v1125, %v1158
        %v1189 = vmul.f32 %v1129, %v1158
        %v1190 = vmul.f32 %v1133, %v1158
        %v1191 = vmul.f32 %v1137, %v1158
        %v1192 = vmul.f32 %v1141, %v1158
        %v1193 = vmul.f32 %v1145, %v1158
        %v1194 = vmul.f32 %v1149, %v1158
        %v1195 = vmul.f32 %v1153, %v1158
        %v1196 = vadd.f32 %v970, %v1159
        %v1197 = vadd.f32 %v971, %v1160
        %v1198 = vadd.f32 %v972, %v1161
        %v1199 = vadd.f32 %v973, %v1162
        %v1200 = vadd.f32 %v974, %v1163
        %v1201 = vadd.f32 %v975, %v1164
        %v1202 = vadd.f32 %v976, %v1165
        %v1203 = vadd.f32 %v977, %v1166
        %v1204 = vadd.f32 %v978, %v1167
        %v1205 = vadd.f32 %v979, %v1168
        %v1206 = vadd.f32 %v980, %v1169
        %v1207 = vadd.f32 %v981, %v1170
        %v1208 = vadd.f32 %v982, %v1171
        %v1209 = vadd.f32 %v983, %v1172
        %v1210 = vadd.f32 %v984, %v1173
        %v1211 = vadd.f32 %v985, %v1174
        %v1212 = vadd.f32 %v986, %v1175
        %v1213 = vadd.f32 %v987, %v1176
        %v1214 = vadd.f32 %v988, %v1177
        %v1215 = vadd.f32 %v989, %v1178
        %v1216 = vadd.f32 %v990, %v1179
        %v1217 = vadd.f32 %v991, %v1180
        %v1218 = vadd.f32 %v992, %v1181
        %v1219 = vadd.f32 %v993, %v1182
        %v1220 = vadd.f32 %v994, %v1183
        %v1221 = vadd.f32 %v995, %v1184
        %v1222 = vadd.f32 %v996, %v1185
        %v1223 = vadd.f32 %v997, %v1186
        %v1224 = vadd.f32 %v998, %v1187
        %v1225 = vadd.f32 %v999, %v1188
        %v1226 = vadd.f32 %v1000, %v1189
        %v1227 = vadd.f32 %v1001, %v1190
        %v1228 = vadd.f32 %v1002, %v1191
        %v1229 = vadd.f32 %v1003, %v1192
        %v1230 = vadd.f32 %v1004, %v1193
        %v1231 = vadd.f32 %v1005, %v1194
        %v1232 = vadd.f32 %v1006, %v1195
        %v1233 = vmax.f32 %v1196, 0.0
        %v1234 = vmax.f32 %v1197, 0.0
        %v1235 = vmax.f32 %v1198, 0.0
        %v1236 = vmax.f32 %v1199, 0.0
        %v1237 = vmax.f32 %v1200, 0.0
        %v1238 = vmax.f32 %v1201, 0.0
        %v1239 = vmax.f32 %v1202, 0.0
        %v1240 = vmax.f32 %v1203, 0.0
        %v1241 = vmax.f32 %v1204, 0.0
        %v1242 = vmax.f32 %v1205, 0.0
        %v1243 = vmax.f32 %v1206, 0.0
        %v1244 = vmax.f32 %v1207, 0.0
        %v1245 = vmax.f32 %v1208, 0.0
        %v1246 = vmax.f32 %v1209, 0.0
        %v1247 = vmax.f32 %v1210, 0.0
        %v1248 = vmax.f32 %v1211, 0.0
        %v1249 = vmax.f32 %v1212, 0.0
        %v1250 = vmax.f32 %v1213, 0.0
        %v1251 = vmax.f32 %v1214, 0.0
        %v1252 = vmax.f32 %v1215, 0.0
        %v1253 = vmax.f32 %v1216, 0.0
        %v1254 = vmax.f32 %v1217, 0.0
        %v1255 = vmax.f32 %v1218, 0.0
        %v1256 = vmax.f32 %v1219, 0.0
        %v1257 = vmax.f32 %v1220, 0.0
        %v1258 = vmax.f32 %v1221, 0.0
        %v1259 = vmax.f32 %v1222, 0.0
        %v1260 = vmax.f32 %v1223, 0.0
        %v1261 = vmax.f32 %v1224, 0.0
        %v1262 = vmax.f32 %v1225, 0.0
        %v1263 = vmax.f32 %v1226, 0.0
        %v1264 = vmax.f32 %v1227, 0.0
        %v1265 = vmax.f32 %v1228, 0.0
        %v1266 = vmax.f32 %v1229, 0.0
        %v1267 = vmax.f32 %v1230, 0.0
        %v1268 = vmax.f32 %v1231, 0.0
        %v1269 = vmax.f32 %v1232, 0.0
        %v1270 = vpack.c.bf16 %v1234, %v1233
        %v1271 = vpack.c.bf16 %v1236, %v1235
        %v1272 = vpack.c.bf16 %v1238, %v1237
        %v1273 = vpack.c.bf16 %v1240, %v1239
        %v1274 = vpack.c.bf16 %v1242, %v1241
        %v1275 = vpack.c.bf16 %v1244, %v1243
        %v1276 = vpack.c.bf16 %v1246, %v1245
        %v1277 = vpack.c.bf16 %v1248, %v1247
        %v1278 = vpack.c.bf16 %v1250, %v1249
        %v1279 = vpack.c.bf16 %v1252, %v1251
        %v1280 = vpack.c.bf16 %v1254, %v1253
        %v1281 = vpack.c.bf16 %v1256, %v1255
        %v1282 = vpack.c.bf16 %v1258, %v1257
        %v1283 = vpack.c.bf16 %v1260, %v1259
        %v1284 = vpack.c.bf16 %v1262, %v1261
        %v1285 = vpack.c.bf16 %v1264, %v1263
        %v1286 = vpack.c.bf16 %v1266, %v1265
        %v1287 = vpack.c.bf16 %v1268, %v1267
        %v1288 = vpack.c.bf16 %v1269, %v1269
        %v1289 = vld [vmem:[%s3] sm:$0xf]
        %v1290 = vld [vmem:[%s3 + $0x4] sm:$0xf]
        %v1291 = vld [vmem:[%s3 + $0x8] sm:$0xf]
        %v1292 = vld [vmem:[%s3 + $0xc] sm:$0xf]
        %v1293 = vld [vmem:[%s3 + $0x10] sm:$0xf]
        %v1294 = vld [vmem:[%s3 + $0x14] sm:$0xf]
        %v1295 = vld [vmem:[%s3 + $0x18] sm:$0xf]
        %v1296 = vld [vmem:[%s3 + $0x1c] sm:$0xf]
        %v1297 = vld [vmem:[%s3 + $0x20] sm:$0xf]
        %v1298 = vld [vmem:[%s3 + $0x24] sm:$0xf]
        %v1299 = vld [vmem:[%s3 + $0x28] sm:$0xf]
        %v1300 = vld [vmem:[%s3 + $0x2c] sm:$0xf]
        %v1301 = vld [vmem:[%s3 + $0x30] sm:$0xf]
        %v1302 = vld [vmem:[%s3 + $0x34] sm:$0xf]
        %v1303 = vld [vmem:[%s3 + $0x38] sm:$0xf]
        %v1304 = vld [vmem:[%s3 + $0x3c] sm:$0xf]
        %v1305 = vld [vmem:[%s4] sm:$0x1]
        %v1307 = vlaneseq
        %v1308 = vshrl.u32 %v1307, 7
        %v1309 = vsub.s32 0, %v1308
        %v1310 = vrot.slane %v1305, %v1309
        %v1328 = vunpack.c.l.b16 %v1289
        %v1329 = vunpack.c.l.b16 %v1290
        %v1330 = vunpack.c.l.b16 %v1291
        %v1331 = vunpack.c.l.b16 %v1292
        %v1332 = vunpack.c.l.b16 %v1293
        %v1333 = vunpack.c.l.b16 %v1294
        %v1334 = vunpack.c.l.b16 %v1295
        %v1335 = vunpack.c.l.b16 %v1296
        %v1336 = vunpack.c.l.b16 %v1297
        %v1337 = vunpack.c.l.b16 %v1298
        %v1338 = vunpack.c.l.b16 %v1299
        %v1339 = vunpack.c.l.b16 %v1300
        %v1340 = vunpack.c.l.b16 %v1301
        %v1341 = vunpack.c.l.b16 %v1302
        %v1342 = vunpack.c.l.b16 %v1303
        %v1343 = vunpack.c.l.b16 %v1304
        %v1344 = vpack.c.b16 %v1329, %v1328
        %v1345 = vpack.c.b16 %v1331, %v1330
        %v1346 = vpack.c.b16 %v1333, %v1332
        %v1347 = vpack.c.b16 %v1335, %v1334
        %v1348 = vpack.c.b16 %v1337, %v1336
        %v1349 = vpack.c.b16 %v1339, %v1338
        %v1350 = vpack.c.b16 %v1341, %v1340
        %v1351 = vpack.c.b16 %v1343, %v1342
        %1360 = vmatprep.subr.bf16.mxu0 0
        %1361 = vmatpush1.bf16.msra.mxu0 %v1344
        %1362 = vmatprep.subr.bf16.mxu0 0
        %1363 = vmatpush1.bf16.msra.mxu0 %v1345
        %1364 = vmatprep.subr.bf16.mxu0 0
        %1365 = vmatpush1.bf16.msra.mxu0 %v1346
        %1366 = vmatprep.subr.bf16.mxu0 0
        %1367 = vmatpush1.bf16.msra.mxu0 %v1347
        %1368 = vmatprep.subr.bf16.mxu0 0
        %1369 = vmatpush1.bf16.msra.mxu0 %v1348
        %1370 = vmatprep.subr.bf16.mxu0 0
        %1371 = vmatpush1.bf16.msra.mxu0 %v1349
        %1372 = vmatprep.subr.bf16.mxu0 0
        %1373 = vmatpush1.bf16.msra.mxu0 %v1350
        %1374 = vmatprep.subr.bf16.mxu0 0
        %1375 = vmatpush1.bf16.msra.mxu0 %v1351
        %1376 = vmatprep.subr.bf16.mxu0 0
        %1377 = vmatpush1.bf16.msra.mxu0 0
        %1378 = vmatprep.subr.bf16.mxu0 0
        %1379 = vmatpush1.bf16.msra.mxu0 0
        %1380 = vmatprep.subr.bf16.mxu0 0
        %1381 = vmatpush1.bf16.msra.mxu0 0
        %1382 = vmatprep.subr.bf16.mxu0 0
        %1383 = vmatpush1.bf16.msra.mxu0 0
        %1384 = vmatprep.subr.bf16.mxu0 0
        %1385 = vmatpush1.bf16.msra.mxu0 0
        %1386 = vmatprep.subr.bf16.mxu0 0
        %1387 = vmatpush1.bf16.msra.mxu0 0
        %1388 = vmatprep.subr.bf16.mxu0 0
        %1389 = vmatpush1.bf16.msra.mxu0 0
        %1390 = vmatprep.subr.bf16.mxu0 0
        %1391 = vmatpush1.bf16.msra.mxu0 0
        %1392 = vmatprep.mubr.bf16.mxu0 0
        %1393 = vmatmul.mubr.bf16.gmra.mrb[0].mxu0 %v1270
        %v1394 = vpop.f32.mrb[0].mxu0
        %v1395 = vadd.f32 %v1310, %v1394
        %v1396 = vpop.f32.mrb[0].mxu0
        %v1397 = vpop.f32.mrb[0].mxu0
        %v1398 = vadd.f32 %v1310, %v1397
        %v1399 = vpop.f32.mrb[0].mxu0
        %1400 = vmatprep.mubr.bf16.mxu0 0
        %1401 = vmatmul.mubr.bf16.gmra.mrb[0].mxu0 %v1271
        %v1402 = vpop.f32.mrb[0].mxu0
        %v1403 = vadd.f32 %v1310, %v1402
        %v1404 = vpop.f32.mrb[0].mxu0
        %v1405 = vpop.f32.mrb[0].mxu0
        %v1406 = vadd.f32 %v1310, %v1405
        %v1407 = vpop.f32.mrb[0].mxu0
        %1408 = vmatprep.mubr.bf16.mxu0 0
        %1409 = vmatmul.mubr.bf16.gmra.mrb[0].mxu0 %v1272
        %v1410 = vpop.f32.mrb[0].mxu0
        %v1411 = vadd.f32 %v1310, %v1410
        %v1412 = vpop.f32.mrb[0].mxu0
        %v1413 = vpop.f32.mrb[0].mxu0
        %v1414 = vadd.f32 %v1310, %v1413
        %v1415 = vpop.f32.mrb[0].mxu0
        %1416 = vmatprep.mubr.bf16.mxu0 0
        %1417 = vmatmul.mubr.bf16.gmra.mrb[0].mxu0 %v1273
        %v1418 = vpop.f32.mrb[0].mxu0
        %v1419 = vadd.f32 %v1310, %v1418
        %v1420 = vpop.f32.mrb[0].mxu0
        %v1421 = vpop.f32.mrb[0].mxu0
        %v1422 = vadd.f32 %v1310, %v1421
        %v1423 = vpop.f32.mrb[0].mxu0
        %1424 = vmatprep.mubr.bf16.mxu0 0
        %1425 = vmatmul.mubr.bf16.gmra.mrb[0].mxu0 %v1274
        %v1426 = vpop.f32.mrb[0].mxu0
        %v1427 = vadd.f32 %v1310, %v1426
        %v1428 = vpop.f32.mrb[0].mxu0
        %v1429 = vpop.f32.mrb[0].mxu0
        %v1430 = vadd.f32 %v1310, %v1429
        %v1431 = vpop.f32.mrb[0].mxu0
        %1432 = vmatprep.mubr.bf16.mxu0 0
        %1433 = vmatmul.mubr.bf16.gmra.mrb[0].mxu0 %v1275
        %v1434 = vpop.f32.mrb[0].mxu0
        %v1435 = vadd.f32 %v1310, %v1434
        %v1436 = vpop.f32.mrb[0].mxu0
        %v1437 = vpop.f32.mrb[0].mxu0
        %v1438 = vadd.f32 %v1310, %v1437
        %v1439 = vpop.f32.mrb[0].mxu0
        %1440 = vmatprep.mubr.bf16.mxu0 0
        %1441 = vmatmul.mubr.bf16.gmra.mrb[0].mxu0 %v1276
        %v1442 = vpop.f32.mrb[0].mxu0
        %v1443 = vadd.f32 %v1310, %v1442
        %v1444 = vpop.f32.mrb[0].mxu0
        %v1445 = vpop.f32.mrb[0].mxu0
        %v1446 = vadd.f32 %v1310, %v1445
        %v1447 = vpop.f32.mrb[0].mxu0
        %1448 = vmatprep.mubr.bf16.mxu0 0
        %1449 = vmatmul.mubr.bf16.gmra.mrb[0].mxu0 %v1277
        %v1450 = vpop.f32.mrb[0].mxu0
        %v1451 = vadd.f32 %v1310, %v1450
        %v1452 = vpop.f32.mrb[0].mxu0
        %v1453 = vpop.f32.mrb[0].mxu0
        %v1454 = vadd.f32 %v1310, %v1453
        %v1455 = vpop.f32.mrb[0].mxu0
        %1456 = vmatprep.mubr.bf16.mxu0 0
        %1457 = vmatmul.mubr.bf16.gmra.mrb[0].mxu0 %v1278
        %v1458 = vpop.f32.mrb[0].mxu0
        %v1459 = vadd.f32 %v1310, %v1458
        %v1460 = vpop.f32.mrb[0].mxu0
        %v1461 = vpop.f32.mrb[0].mxu0
        %v1462 = vadd.f32 %v1310, %v1461
        %v1463 = vpop.f32.mrb[0].mxu0
        %1464 = vmatprep.mubr.bf16.mxu0 0
        %1465 = vmatmul.mubr.bf16.gmra.mrb[0].mxu0 %v1279
        %v1466 = vpop.f32.mrb[0].mxu0
        %v1467 = vadd.f32 %v1310, %v1466
        %v1468 = vpop.f32.mrb[0].mxu0
        %v1469 = vpop.f32.mrb[0].mxu0
        %v1470 = vadd.f32 %v1310, %v1469
        %v1471 = vpop.f32.mrb[0].mxu0
        %1472 = vmatprep.mubr.bf16.mxu0 0
        %1473 = vmatmul.mubr.bf16.gmra.mrb[0].mxu0 %v1280
        %v1474 = vpop.f32.mrb[0].mxu0
        %v1475 = vadd.f32 %v1310, %v1474
        %v1476 = vpop.f32.mrb[0].mxu0
        %v1477 = vpop.f32.mrb[0].mxu0
        %v1478 = vadd.f32 %v1310, %v1477
        %v1479 = vpop.f32.mrb[0].mxu0
        %1480 = vmatprep.mubr.bf16.mxu0 0
        %1481 = vmatmul.mubr.bf16.gmra.mrb[0].mxu0 %v1281
        %v1482 = vpop.f32.mrb[0].mxu0
        %v1483 = vadd.f32 %v1310, %v1482
        %v1484 = vpop.f32.mrb[0].mxu0
        %v1485 = vpop.f32.mrb[0].mxu0
        %v1486 = vadd.f32 %v1310, %v1485
        %v1487 = vpop.f32.mrb[0].mxu0
        %1488 = vmatprep.mubr.bf16.mxu0 0
        %1489 = vmatmul.mubr.bf16.gmra.mrb[0].mxu0 %v1282
        %v1490 = vpop.f32.mrb[0].mxu0
        %v1491 = vadd.f32 %v1310, %v1490
        %v1492 = vpop.f32.mrb[0].mxu0
        %v1493 = vpop.f32.mrb[0].mxu0
        %v1494 = vadd.f32 %v1310, %v1493
        %v1495 = vpop.f32.mrb[0].mxu0
        %1496 = vmatprep.mubr.bf16.mxu0 0
        %1497 = vmatmul.mubr.bf16.gmra.mrb[0].mxu0 %v1283
        %v1498 = vpop.f32.mrb[0].mxu0
        %v1499 = vadd.f32 %v1310, %v1498
        %v1500 = vpop.f32.mrb[0].mxu0
        %v1501 = vpop.f32.mrb[0].mxu0
        %v1502 = vadd.f32 %v1310, %v1501
        %v1503 = vpop.f32.mrb[0].mxu0
        %1504 = vmatprep.mubr.bf16.mxu0 0
        %1505 = vmatmul.mubr.bf16.gmra.mrb[0].mxu0 %v1284
        %v1506 = vpop.f32.mrb[0].mxu0
        %v1507 = vadd.f32 %v1310, %v1506
        %v1508 = vpop.f32.mrb[0].mxu0
        %v1509 = vpop.f32.mrb[0].mxu0
        %v1510 = vadd.f32 %v1310, %v1509
        %v1511 = vpop.f32.mrb[0].mxu0
        %1512 = vmatprep.mubr.bf16.mxu0 0
        %1513 = vmatmul.mubr.bf16.gmra.mrb[0].mxu0 %v1285
        %v1514 = vpop.f32.mrb[0].mxu0
        %v1515 = vadd.f32 %v1310, %v1514
        %v1516 = vpop.f32.mrb[0].mxu0
        %v1517 = vpop.f32.mrb[0].mxu0
        %v1518 = vadd.f32 %v1310, %v1517
        %v1519 = vpop.f32.mrb[0].mxu0
        %1520 = vmatprep.mubr.bf16.mxu0 0
        %1521 = vmatmul.mubr.bf16.gmra.mrb[0].mxu0 %v1286
        %v1522 = vpop.f32.mrb[0].mxu0
        %v1523 = vadd.f32 %v1310, %v1522
        %v1524 = vpop.f32.mrb[0].mxu0
        %v1525 = vpop.f32.mrb[0].mxu0
        %v1526 = vadd.f32 %v1310, %v1525
        %v1527 = vpop.f32.mrb[0].mxu0
        %1528 = vmatprep.mubr.bf16.mxu0 0
        %1529 = vmatmul.mubr.bf16.gmra.mrb[0].mxu0 %v1287
        %v1530 = vpop.f32.mrb[0].mxu0
        %v1531 = vadd.f32 %v1310, %v1530
        %v1532 = vpop.f32.mrb[0].mxu0
        %v1533 = vpop.f32.mrb[0].mxu0
        %v1534 = vadd.f32 %v1310, %v1533
        %v1535 = vpop.f32.mrb[0].mxu0
        %1536 = vmatprep.mubr.bf16.mxu0 0
        %1537 = vmatmul.mubr.bf16.gmra.mrb[0].mxu0 %v1288
        %v1538 = vpop.f32.mrb[0].mxu0
        %v1539 = vadd.f32 %v1310, %v1538
        %v1540 = vpop.f32.mrb[0].mxu0
        %v1541 = vpop.f32.mrb[0].mxu0
        %v1542 = vpop.f32.mrb[0].mxu0
        %1543 = vdwg.mxu0
        %1544 = vst [vmem:[%s226] sm:$0xff] %v1395
        %1545 = vst [vmem:[%s226 + $0x8] sm:$0xff] %v1398
        %1546 = vst [vmem:[%s226 + $0x10] sm:$0xff] %v1403
        %1547 = vst [vmem:[%s226 + $0x18] sm:$0xff] %v1406
        %1548 = vst [vmem:[%s226 + $0x20] sm:$0xff] %v1411
        %1549 = vst [vmem:[%s226 + $0x28] sm:$0xff] %v1414
        %1550 = vst [vmem:[%s226 + $0x30] sm:$0xff] %v1419
        %1551 = vst [vmem:[%s226 + $0x38] sm:$0xff] %v1422
        %1552 = vst [vmem:[%s226 + $0x40] sm:$0xff] %v1427
        %1553 = vst [vmem:[%s226 + $0x48] sm:$0xff] %v1430
        %1554 = vst [vmem:[%s226 + $0x50] sm:$0xff] %v1435
        %1555 = vst [vmem:[%s226 + $0x58] sm:$0xff] %v1438
        %1556 = vst [vmem:[%s226 + $0x60] sm:$0xff] %v1443
        %1557 = vst [vmem:[%s226 + $0x68] sm:$0xff] %v1446
        %1558 = vst [vmem:[%s226 + $0x70] sm:$0xff] %v1451
        %1559 = vst [vmem:[%s226 + $0x78] sm:$0xff] %v1454
        %1560 = vst [vmem:[%s226 + $0x80] sm:$0xff] %v1459
        %1561 = vst [vmem:[%s226 + $0x88] sm:$0xff] %v1462
        %1562 = vst [vmem:[%s226 + $0x90] sm:$0xff] %v1467
        %1563 = vst [vmem:[%s226 + $0x98] sm:$0xff] %v1470
        %1564 = vst [vmem:[%s226 + $0xa0] sm:$0xff] %v1475
        %1565 = vst [vmem:[%s226 + $0xa8] sm:$0xff] %v1478
        %1566 = vst [vmem:[%s226 + $0xb0] sm:$0xff] %v1483
        %1567 = vst [vmem:[%s226 + $0xb8] sm:$0xff] %v1486
        %1568 = vst [vmem:[%s226 + $0xc0] sm:$0xff] %v1491
        %1569 = vst [vmem:[%s226 + $0xc8] sm:$0xff] %v1494
        %1570 = vst [vmem:[%s226 + $0xd0] sm:$0xff] %v1499
        %1571 = vst [vmem:[%s226 + $0xd8] sm:$0xff] %v1502
        %1572 = vst [vmem:[%s226 + $0xe0] sm:$0xff] %v1507
        %1573 = vst [vmem:[%s226 + $0xe8] sm:$0xff] %v1510
        %1574 = vst [vmem:[%s226 + $0xf0] sm:$0xff] %v1515
        %1575 = vst [vmem:[%s226 + $0xf8] sm:$0xff] %v1518
        %1576 = vst [vmem:[%s226 + $0x100] sm:$0xff] %v1523
        %1577 = vst [vmem:[%s226 + $0x108] sm:$0xff] %v1526
        %1578 = vst [vmem:[%s226 + $0x110] sm:$0xff] %v1531
        %1579 = vst [vmem:[%s226 + $0x118] sm:$0xff] %v1534
        %1580 = vst [vmem:[%s226 + $0x120] sm:$0xff] %v1539
        %s1581 = sand.u32 %s134, 1
        %s1582 = sand.u32 %s134, 1
        %s1583 = smul.addr %s1582, 296
        %s1584 = scalar_lea.vmem [#allocation2], %s1583
        // Predicated region
        $region41: #{net_forward.1} parent=39 // pred_check
          %p1585 = pneg %p144
        $region42: #{net_forward.1} parent=39 // pred_check_branch
          %1587 = sbr.rel (%p1585) target = $region44
        $region43: #{net_forward.1} parent=39 // pred_region
          %s1588 = smul.u32 37, %s16
          %s1589 = ssub.s32 38, %s1588
          %p1590 = scmp.lt.s32.totalorder %s1589, 37
          %s1591 = scalar_select %p1590, %s1589, 37
          %s1592 = smul.u32 128, %s1591
          %p1593 = scmp.ne.s32.totalorder 0, %s1592
          %s1594 = smul.addr %s1588, 8
          %s1595 = scalar_lea.vmem %s5, %s1594
          // Predicated region
          $region45: #{net_forward.1} parent=43 // pred_check
            %p1596 = pneg %p1593
          $region46: #{net_forward.1} parent=43 // pred_check_branch
            %1598 = sbr.rel (%p1596) target = $region48
          $region47: #{net_forward.1} parent=43 // pred_region
            // Predicated region
            $region49: #{net_forward.1} parent=47 // pred_check
              _
            $region50: #{net_forward.1} parent=47 // pred_check_branch
              %1600 = sbr.rel (0) target = $region52
            $region51: #{net_forward.1} parent=47 // pred_region
              // Predicated region
              $region71: #{net_forward.1} parent=51 // pred_check
                _
              $region72: #{net_forward.1} parent=51 // pred_check_branch
                %1722 = sbr.rel (0) target = $region74
              $region73: #{net_forward.1} parent=51 // pred_region
                %s1723 = sdiv.u32.pop %s1591, 37
                %s1724 = srem.u32.pop %s1591, 37
                // While loop
                $region75: #{net_forward.1} parent=73 // loop_pre_header
                  _
                $region76: #{net_forward.1} parent=73 // loop_header
                  %s1726 = sphi 0, %s1728
                  %p1727 = scmp.ge.s32.totalorder %s1726, %s1723
                  %s1731 = sphi 0, %s1810
                  %s1732 = sphi %s1584, %s1813
                  %s1733 = sphi %s1595, %s1814
                $region77: #{net_forward.1} parent=73 // loop_header_branch
                  %1730 = sbr.rel (%p1727) target = $region81
                $region78: #{net_forward.1} parent=73 // loop_body
                  %v1734 = vld [vmem:[%s1732] sm:$0xff]
                  %1735 = vst [vmem:[%s1733] sm:$0xff] %v1734
                  %v1736 = vld [vmem:[%s1732 + $0x8] sm:$0xff]
                  %1737 = vst [vmem:[%s1733 + $0x8] sm:$0xff] %v1736
                  %v1738 = vld [vmem:[%s1732 + $0x10] sm:$0xff]
                  %1739 = vst [vmem:[%s1733 + $0x10] sm:$0xff] %v1738
                  %v1740 = vld [vmem:[%s1732 + $0x18] sm:$0xff]
                  %1741 = vst [vmem:[%s1733 + $0x18] sm:$0xff] %v1740
                  %v1742 = vld [vmem:[%s1732 + $0x20] sm:$0xff]
                  %1743 = vst [vmem:[%s1733 + $0x20] sm:$0xff] %v1742
                  %v1744 = vld [vmem:[%s1732 + $0x28] sm:$0xff]
                  %1745 = vst [vmem:[%s1733 + $0x28] sm:$0xff] %v1744
                  %v1746 = vld [vmem:[%s1732 + $0x30] sm:$0xff]
                  %1747 = vst [vmem:[%s1733 + $0x30] sm:$0xff] %v1746
                  %v1748 = vld [vmem:[%s1732 + $0x38] sm:$0xff]
                  %1749 = vst [vmem:[%s1733 + $0x38] sm:$0xff] %v1748
                  %v1750 = vld [vmem:[%s1732 + $0x40] sm:$0xff]
                  %1751 = vst [vmem:[%s1733 + $0x40] sm:$0xff] %v1750
                  %v1752 = vld [vmem:[%s1732 + $0x48] sm:$0xff]
                  %1753 = vst [vmem:[%s1733 + $0x48] sm:$0xff] %v1752
                  %v1754 = vld [vmem:[%s1732 + $0x50] sm:$0xff]
                  %1755 = vst [vmem:[%s1733 + $0x50] sm:$0xff] %v1754
                  %v1756 = vld [vmem:[%s1732 + $0x58] sm:$0xff]
                  %1757 = vst [vmem:[%s1733 + $0x58] sm:$0xff] %v1756
                  %v1758 = vld [vmem:[%s1732 + $0x60] sm:$0xff]
                  %1759 = vst [vmem:[%s1733 + $0x60] sm:$0xff] %v1758
                  %v1760 = vld [vmem:[%s1732 + $0x68] sm:$0xff]
                  %1761 = vst [vmem:[%s1733 + $0x68] sm:$0xff] %v1760
                  %v1762 = vld [vmem:[%s1732 + $0x70] sm:$0xff]
                  %1763 = vst [vmem:[%s1733 + $0x70] sm:$0xff] %v1762
                  %v1764 = vld [vmem:[%s1732 + $0x78] sm:$0xff]
                  %1765 = vst [vmem:[%s1733 + $0x78] sm:$0xff] %v1764
                  %v1766 = vld [vmem:[%s1732 + $0x80] sm:$0xff]
                  %1767 = vst [vmem:[%s1733 + $0x80] sm:$0xff] %v1766
                  %v1768 = vld [vmem:[%s1732 + $0x88] sm:$0xff]
                  %1769 = vst [vmem:[%s1733 + $0x88] sm:$0xff] %v1768
                  %v1770 = vld [vmem:[%s1732 + $0x90] sm:$0xff]
                  %1771 = vst [vmem:[%s1733 + $0x90] sm:$0xff] %v1770
                  %v1772 = vld [vmem:[%s1732 + $0x98] sm:$0xff]
                  %1773 = vst [vmem:[%s1733 + $0x98] sm:$0xff] %v1772
                  %v1774 = vld [vmem:[%s1732 + $0xa0] sm:$0xff]
                  %1775 = vst [vmem:[%s1733 + $0xa0] sm:$0xff] %v1774
                  %v1776 = vld [vmem:[%s1732 + $0xa8] sm:$0xff]
                  %1777 = vst [vmem:[%s1733 + $0xa8] sm:$0xff] %v1776
                  %v1778 = vld [vmem:[%s1732 + $0xb0] sm:$0xff]
                  %1779 = vst [vmem:[%s1733 + $0xb0] sm:$0xff] %v1778
                  %v1780 = vld [vmem:[%s1732 + $0xb8] sm:$0xff]
                  %1781 = vst [vmem:[%s1733 + $0xb8] sm:$0xff] %v1780
                  %v1782 = vld [vmem:[%s1732 + $0xc0] sm:$0xff]
                  %1783 = vst [vmem:[%s1733 + $0xc0] sm:$0xff] %v1782
                  %v1784 = vld [vmem:[%s1732 + $0xc8] sm:$0xff]
                  %1785 = vst [vmem:[%s1733 + $0xc8] sm:$0xff] %v1784
                  %v1786 = vld [vmem:[%s1732 + $0xd0] sm:$0xff]
                  %1787 = vst [vmem:[%s1733 + $0xd0] sm:$0xff] %v1786
                  %v1788 = vld [vmem:[%s1732 + $0xd8] sm:$0xff]
                  %1789 = vst [vmem:[%s1733 + $0xd8] sm:$0xff] %v1788
                  %v1790 = vld [vmem:[%s1732 + $0xe0] sm:$0xff]
                  %1791 = vst [vmem:[%s1733 + $0xe0] sm:$0xff] %v1790
                  %v1792 = vld [vmem:[%s1732 + $0xe8] sm:$0xff]
                  %1793 = vst [vmem:[%s1733 + $0xe8] sm:$0xff] %v1792
                  %v1794 = vld [vmem:[%s1732 + $0xf0] sm:$0xff]
                  %1795 = vst [vmem:[%s1733 + $0xf0] sm:$0xff] %v1794
                  %v1796 = vld [vmem:[%s1732 + $0xf8] sm:$0xff]
                  %1797 = vst [vmem:[%s1733 + $0xf8] sm:$0xff] %v1796
                  %v1798 = vld [vmem:[%s1732 + $0x100] sm:$0xff]
                  %1799 = vst [vmem:[%s1733 + $0x100] sm:$0xff] %v1798
                  %v1800 = vld [vmem:[%s1732 + $0x108] sm:$0xff]
                  %1801 = vst [vmem:[%s1733 + $0x108] sm:$0xff] %v1800
                  %v1802 = vld [vmem:[%s1732 + $0x110] sm:$0xff]
                  %1803 = vst [vmem:[%s1733 + $0x110] sm:$0xff] %v1802
                  %v1804 = vld [vmem:[%s1732 + $0x118] sm:$0xff]
                  %1805 = vst [vmem:[%s1733 + $0x118] sm:$0xff] %v1804
                  %v1806 = vld [vmem:[%s1732 + $0x120] sm:$0xff]
                  %1807 = vst [vmem:[%s1733 + $0x120] sm:$0xff] %v1806
                  %s1808 = sadd.s32 1, %s1731
                  %p1809 = scmp.ge.s32.totalorder %s1808, %s1723
                  %s1810 = scalar_select %p1809, 0, %s1808
                  %s1811 = smul.u32 %s1810, 296
                  %s1812 = smul.u32 %s1810, 296
                  %s1813 = scalar_lea.vmem %s1584, %s1811 [#allocation2]
                  %s1814 = scalar_lea.vmem %s1595, %s1812
                $region79: #{net_forward.1} parent=73 // loop_footer
                  %s1728 = sadd.s32 %s1726, 1
                $region80: #{net_forward.1} parent=73 // loop_footer_branch
                  %1725 = sbr.rel target = $region76
                $region81: #{net_forward.1} parent=73 // loop_exit
                  _
                %s1815 = sdiv.u32.pop %s1591, 37
                %s1816 = srem.u32.pop %s1591, 37
                %s1817 = smul.u32 %s1815, 37
                %s1818 = smul.u32 8, %s1817
                %s1819 = scalar_lea.vmem %s1584, %s1818 [#allocation2]
                %s1820 = smul.u32 8, %s1817
                %s1821 = scalar_lea.vmem %s1595, %s1820
                // While loop
                $region82: #{net_forward.1} parent=73 // loop_pre_header
                  _
                $region83: #{net_forward.1} parent=73 // loop_header
                  %s1823 = sphi 0, %s1825
                  %p1824 = scmp.ge.s32.totalorder %s1823, %s1816
                  %s1828 = sphi 0, %s1835
                  %s1829 = sphi %s1819, %s1838
                  %s1830 = sphi %s1821, %s1839
                $region84: #{net_forward.1} parent=73 // loop_header_branch
                  %1827 = sbr.rel (%p1824) target = $region88
                $region85: #{net_forward.1} parent=73 // loop_body
                  %v1831 = vld [vmem:[%s1829] sm:$0xff]
                  %1832 = vst [vmem:[%s1830] sm:$0xff] %v1831
                  %s1833 = sadd.s32 1, %s1828
                  %p1834 = scmp.ge.s32.totalorder %s1833, %s1816
                  %s1835 = scalar_select %p1834, 0, %s1833
                  %s1836 = smul.u32 %s1835, 8
                  %s1837 = smul.u32 %s1835, 8
                  %s1838 = scalar_lea.vmem %s1819, %s1836 [#allocation2]
                  %s1839 = scalar_lea.vmem %s1821, %s1837
                $region86: #{net_forward.1} parent=73 // loop_footer
                  %s1825 = sadd.s32 %s1823, 1
                $region87: #{net_forward.1} parent=73 // loop_footer_branch
                  %1822 = sbr.rel target = $region83
                $region88: #{net_forward.1} parent=73 // loop_exit
                  _
              $region74: #{net_forward.1} parent=51 // pred_fallthru
                _
              // Predicated region
              $region89: #{net_forward.1} parent=51 // pred_check
                _
              $region90: #{net_forward.1} parent=51 // pred_check_branch
                %1841 = sbr.rel target = $region92
              $region91: #{net_forward.1} parent=51 // pred_region
                _
              $region92: #{net_forward.1} parent=51 // pred_fallthru
                _
            $region52: #{net_forward.1} parent=47 // pred_fallthru
              _
            // Predicated region
            $region53: #{net_forward.1} parent=47 // pred_check
              _
            $region54: #{net_forward.1} parent=47 // pred_check_branch
              %1602 = sbr.rel target = $region56
            $region55: #{net_forward.1} parent=47 // pred_region
              %s1604 = sdiv.u32.pop %s1591, 37
              %s1605 = srem.u32.pop %s1591, 37
              // While loop
              $region57: #{net_forward.1} parent=55 // loop_pre_header
                _
              $region58: #{net_forward.1} parent=55 // loop_header
                %s1607 = sphi 0, %s1609
                %p1608 = scmp.ge.s32.totalorder %s1607, %s1604
                %s1612 = sphi 0, %s1691
                %s1613 = sphi %s1584, %s1694
                %s1614 = sphi %s1595, %s1695
              $region59: #{net_forward.1} parent=55 // loop_header_branch
                %1611 = sbr.rel (%p1608) target = $region63
              $region60: #{net_forward.1} parent=55 // loop_body
                %v1615 = vld [vmem:[%s1613] sm:$0xff]
                %1616 = vst [vmem:[%s1614] sm:$0xff] %v1615
                %v1617 = vld [vmem:[%s1613 + $0x8] sm:$0xff]
                %1618 = vst [vmem:[%s1614 + $0x8] sm:$0xff] %v1617
                %v1619 = vld [vmem:[%s1613 + $0x10] sm:$0xff]
                %1620 = vst [vmem:[%s1614 + $0x10] sm:$0xff] %v1619
                %v1621 = vld [vmem:[%s1613 + $0x18] sm:$0xff]
                %1622 = vst [vmem:[%s1614 + $0x18] sm:$0xff] %v1621
                %v1623 = vld [vmem:[%s1613 + $0x20] sm:$0xff]
                %1624 = vst [vmem:[%s1614 + $0x20] sm:$0xff] %v1623
                %v1625 = vld [vmem:[%s1613 + $0x28] sm:$0xff]
                %1626 = vst [vmem:[%s1614 + $0x28] sm:$0xff] %v1625
                %v1627 = vld [vmem:[%s1613 + $0x30] sm:$0xff]
                %1628 = vst [vmem:[%s1614 + $0x30] sm:$0xff] %v1627
                %v1629 = vld [vmem:[%s1613 + $0x38] sm:$0xff]
                %1630 = vst [vmem:[%s1614 + $0x38] sm:$0xff] %v1629
                %v1631 = vld [vmem:[%s1613 + $0x40] sm:$0xff]
                %1632 = vst [vmem:[%s1614 + $0x40] sm:$0xff] %v1631
                %v1633 = vld [vmem:[%s1613 + $0x48] sm:$0xff]
                %1634 = vst [vmem:[%s1614 + $0x48] sm:$0xff] %v1633
                %v1635 = vld [vmem:[%s1613 + $0x50] sm:$0xff]
                %1636 = vst [vmem:[%s1614 + $0x50] sm:$0xff] %v1635
                %v1637 = vld [vmem:[%s1613 + $0x58] sm:$0xff]
                %1638 = vst [vmem:[%s1614 + $0x58] sm:$0xff] %v1637
                %v1639 = vld [vmem:[%s1613 + $0x60] sm:$0xff]
                %1640 = vst [vmem:[%s1614 + $0x60] sm:$0xff] %v1639
                %v1641 = vld [vmem:[%s1613 + $0x68] sm:$0xff]
                %1642 = vst [vmem:[%s1614 + $0x68] sm:$0xff] %v1641
                %v1643 = vld [vmem:[%s1613 + $0x70] sm:$0xff]
                %1644 = vst [vmem:[%s1614 + $0x70] sm:$0xff] %v1643
                %v1645 = vld [vmem:[%s1613 + $0x78] sm:$0xff]
                %1646 = vst [vmem:[%s1614 + $0x78] sm:$0xff] %v1645
                %v1647 = vld [vmem:[%s1613 + $0x80] sm:$0xff]
                %1648 = vst [vmem:[%s1614 + $0x80] sm:$0xff] %v1647
                %v1649 = vld [vmem:[%s1613 + $0x88] sm:$0xff]
                %1650 = vst [vmem:[%s1614 + $0x88] sm:$0xff] %v1649
                %v1651 = vld [vmem:[%s1613 + $0x90] sm:$0xff]
                %1652 = vst [vmem:[%s1614 + $0x90] sm:$0xff] %v1651
                %v1653 = vld [vmem:[%s1613 + $0x98] sm:$0xff]
                %1654 = vst [vmem:[%s1614 + $0x98] sm:$0xff] %v1653
                %v1655 = vld [vmem:[%s1613 + $0xa0] sm:$0xff]
                %1656 = vst [vmem:[%s1614 + $0xa0] sm:$0xff] %v1655
                %v1657 = vld [vmem:[%s1613 + $0xa8] sm:$0xff]
                %1658 = vst [vmem:[%s1614 + $0xa8] sm:$0xff] %v1657
                %v1659 = vld [vmem:[%s1613 + $0xb0] sm:$0xff]
                %1660 = vst [vmem:[%s1614 + $0xb0] sm:$0xff] %v1659
                %v1661 = vld [vmem:[%s1613 + $0xb8] sm:$0xff]
                %1662 = vst [vmem:[%s1614 + $0xb8] sm:$0xff] %v1661
                %v1663 = vld [vmem:[%s1613 + $0xc0] sm:$0xff]
                %1664 = vst [vmem:[%s1614 + $0xc0] sm:$0xff] %v1663
                %v1665 = vld [vmem:[%s1613 + $0xc8] sm:$0xff]
                %1666 = vst [vmem:[%s1614 + $0xc8] sm:$0xff] %v1665
                %v1667 = vld [vmem:[%s1613 + $0xd0] sm:$0xff]
                %1668 = vst [vmem:[%s1614 + $0xd0] sm:$0xff] %v1667
                %v1669 = vld [vmem:[%s1613 + $0xd8] sm:$0xff]
                %1670 = vst [vmem:[%s1614 + $0xd8] sm:$0xff] %v1669
                %v1671 = vld [vmem:[%s1613 + $0xe0] sm:$0xff]
                %1672 = vst [vmem:[%s1614 + $0xe0] sm:$0xff] %v1671
                %v1673 = vld [vmem:[%s1613 + $0xe8] sm:$0xff]
                %1674 = vst [vmem:[%s1614 + $0xe8] sm:$0xff] %v1673
                %v1675 = vld [vmem:[%s1613 + $0xf0] sm:$0xff]
                %1676 = vst [vmem:[%s1614 + $0xf0] sm:$0xff] %v1675
                %v1677 = vld [vmem:[%s1613 + $0xf8] sm:$0xff]
                %1678 = vst [vmem:[%s1614 + $0xf8] sm:$0xff] %v1677
                %v1679 = vld [vmem:[%s1613 + $0x100] sm:$0xff]
                %1680 = vst [vmem:[%s1614 + $0x100] sm:$0xff] %v1679
                %v1681 = vld [vmem:[%s1613 + $0x108] sm:$0xff]
                %1682 = vst [vmem:[%s1614 + $0x108] sm:$0xff] %v1681
                %v1683 = vld [vmem:[%s1613 + $0x110] sm:$0xff]
                %1684 = vst [vmem:[%s1614 + $0x110] sm:$0xff] %v1683
                %v1685 = vld [vmem:[%s1613 + $0x118] sm:$0xff]
                %1686 = vst [vmem:[%s1614 + $0x118] sm:$0xff] %v1685
                %v1687 = vld [vmem:[%s1613 + $0x120] sm:$0xff]
                %1688 = vst [vmem:[%s1614 + $0x120] sm:$0xff] %v1687
                %s1689 = sadd.s32 1, %s1612
                %p1690 = scmp.ge.s32.totalorder %s1689, %s1604
                %s1691 = scalar_select %p1690, 0, %s1689
                %s1692 = smul.u32 %s1691, 296
                %s1693 = smul.u32 %s1691, 296
                %s1694 = scalar_lea.vmem %s1584, %s1692 [#allocation2]
                %s1695 = scalar_lea.vmem %s1595, %s1693
              $region61: #{net_forward.1} parent=55 // loop_footer
                %s1609 = sadd.s32 %s1607, 1
              $region62: #{net_forward.1} parent=55 // loop_footer_branch
                %1606 = sbr.rel target = $region58
              $region63: #{net_forward.1} parent=55 // loop_exit
                _
              %s1696 = sdiv.u32.pop %s1591, 37
              %s1697 = srem.u32.pop %s1591, 37
              %s1698 = smul.u32 %s1696, 37
              %s1699 = smul.u32 8, %s1698
              %s1700 = scalar_lea.vmem %s1584, %s1699 [#allocation2]
              %s1701 = smul.u32 8, %s1698
              %s1702 = scalar_lea.vmem %s1595, %s1701
              // While loop
              $region64: #{net_forward.1} parent=55 // loop_pre_header
                _
              $region65: #{net_forward.1} parent=55 // loop_header
                %s1704 = sphi 0, %s1706
                %p1705 = scmp.ge.s32.totalorder %s1704, %s1697
                %s1709 = sphi 0, %s1716
                %s1710 = sphi %s1700, %s1719
                %s1711 = sphi %s1702, %s1720
              $region66: #{net_forward.1} parent=55 // loop_header_branch
                %1708 = sbr.rel (%p1705) target = $region70
              $region67: #{net_forward.1} parent=55 // loop_body
                %v1712 = vld [vmem:[%s1710] sm:$0xff]
                %1713 = vst [vmem:[%s1711] sm:$0xff] %v1712
                %s1714 = sadd.s32 1, %s1709
                %p1715 = scmp.ge.s32.totalorder %s1714, %s1697
                %s1716 = scalar_select %p1715, 0, %s1714
                %s1717 = smul.u32 %s1716, 8
                %s1718 = smul.u32 %s1716, 8
                %s1719 = scalar_lea.vmem %s1700, %s1717 [#allocation2]
                %s1720 = scalar_lea.vmem %s1702, %s1718
              $region68: #{net_forward.1} parent=55 // loop_footer
                %s1706 = sadd.s32 %s1704, 1
              $region69: #{net_forward.1} parent=55 // loop_footer_branch
                %1703 = sbr.rel target = $region65
              $region70: #{net_forward.1} parent=55 // loop_exit
                _
            $region56: #{net_forward.1} parent=47 // pred_fallthru
              _
          $region48: #{net_forward.1} parent=43 // pred_fallthru
            _
          %1842 = vnop
        $region44: #{net_forward.1} parent=39 // pred_fallthru
          _
      $region40: #{net_forward.1} parent=5 // pred_fallthru
        _
      %p1843 = scmp.le.s32.totalorder 2, %s11
      // Predicated region
      $region93: #{net_forward.1} parent=5 // pred_check
        %p1844 = pneg %p1843
      $region94: #{net_forward.1} parent=5 // pred_check_branch
        %1846 = sbr.rel (%p1844) target = $region96
      $region95: #{net_forward.1} parent=5 // pred_region
        %s1847 = ssub.s32 %s11, 2
        // Predicated region
        $region97: #{net_forward.1} parent=95 // pred_check
          %p1848 = pneg %p150
        $region98: #{net_forward.1} parent=95 // pred_check_branch
          %1850 = sbr.rel (%p1848) target = $region100
        $region99: #{net_forward.1} parent=95 // pred_region
          %s1851 = sand.u32 %s135, 1
          %s1852 = sand.u32 %s135, 1
          %s1853 = smul.addr %s1852, 296
          %s1854 = scalar_lea.vmem [#allocation2], %s1853
        $region100: #{net_forward.1} parent=95 // pred_fallthru
          _
      $region96: #{net_forward.1} parent=5 // pred_fallthru
        _
    $region6: #{net_forward.1} parent=1 // loop_footer
      %s15 = sadd.s32 1, %s11
    $region7: #{net_forward.1} parent=1 // loop_footer_branch
      %10 = sbr.rel target = $region3
    $region8: #{net_forward.1} parent=1 // loop_exit
      _

</llo_original>
